<compile_context>
chip_gen: v5e
topology: v5e:2x2
jax: 0.10.0
libtpu: 0.0.40
codegen_flags: <defaults>
</compile_context>

<pallas_src>
import functools

import jax
import jax.numpy as jnp
from jax.experimental import pallas as pl
from jax.experimental.pallas import tpu as pltpu

LN_EPS = 1e-5          # PyTorch nn.LayerNorm default
NUM_MATMULS = 7        # Linears per ResidualFeedForward layer


def _layer_norm(h, gamma, beta):
    """LayerNorm over the last dim (f32 math). gamma/beta are (1, D) rows."""
    mean = jnp.mean(h, axis=-1, keepdims=True)
    centered = h - mean
    var = jnp.mean(centered * centered, axis=-1, keepdims=True)
    return centered * jax.lax.rsqrt(var + LN_EPS) * gamma + beta


def rff_kernel(x_ref, *refs):
    """refs = 7 x (w, packed[b;gamma;beta]) inputs, then out_ref, then carry.

    Grid: (row_tile_index, layer_index). The activation for the current row
    tile is carried across the layer axis in `carry_ref` (VMEM, bf16).
    """
    param_refs = refs[: 2 * NUM_MATMULS]
    out_ref = refs[2 * NUM_MATMULS]
    carry_ref = refs[2 * NUM_MATMULS + 1]

    layer = pl.program_id(1)
    last = pl.num_programs(1) - 1

    @pl.when(layer == 0)
    def _():
        carry_ref[...] = x_ref[...].astype(carry_ref.dtype)

    h = carry_ref[...]                                   # bf16 (tm, d_model)
    for k in range(NUM_MATMULS):
        w_ref = param_refs[2 * k]                        # bf16 (fan_in, fan_out)
        p_ref = param_refs[2 * k + 1]                    # f32  (3, fan_out)
        p = p_ref[...]
        y = jnp.dot(h, w_ref[...],
                    preferred_element_type=jnp.float32) + p[0:1, :]
        if k < NUM_MATMULS - 1:                          # last Linear has no ReLU
            y = jnp.maximum(y, 0.0)
        # LN in f32, carry the result in bf16 (next matmul consumes bf16 anyway).
        h = _layer_norm(y, p[1:2, :], p[2:3, :]).astype(jnp.bfloat16)

    # Dropout = identity (eval mode).
    @pl.when(layer != last)
    def _():
        carry_ref[...] = h

    @pl.when(layer == last)
    def _():
        # Write the output directly; skip the redundant carry store+reload.
        out_ref[...] = (h.astype(jnp.float32) + x_ref[...].astype(jnp.float32)
                        ).astype(out_ref.dtype)


def _layer_dims(d_model, hidden_dim):
    h, d = hidden_dim, d_model
    return [(d, 8 * h), (8 * h, 4 * h), (4 * h, 2 * h), (2 * h, 8 * d),
            (8 * d, 4 * d), (4 * d, 2 * d), (2 * d, d)]


def _select_tile_and_vmem(rows, d_model, dims):
    """Generation-aware row-tile and VMEM-limit selection (trace-time)."""
    vmem_cap = 128 * 1024 * 1024
    kind = ""
    try:
        vmem_cap = int(pltpu.get_tpu_info().vmem_capacity_bytes)
    except Exception:
        pass
    try:
        kind = jax.devices()[0].device_kind.lower()
    except Exception:
        pass

    # Row-tile target: FLOPs per re-streamed weight byte must clear the
    # MXU/HBM roofline (v6e needs ~650, v7x ~320, v5e ~240).
    if "v6" in kind:
        target_tm = 768
    elif "v5" in kind:
        target_tm = 384
    elif "7" in kind:
        target_tm = 384
    else:
        target_tm = 512

    # Never request (nearly) the whole physical VMEM: ~75% on 64 MiB parts
    # (v7x), ~82% on 128 MiB parts (v5e/v6e).
    frac = 0.75 if vmem_cap <= 64 * 1024 * 1024 else 0.82
    vmem_budget = int(frac * vmem_cap)

    per_layer_param_bytes = sum(fi * fo * 2 + 3 * fo * 4 for fi, fo in dims)
    max_dim = max([d_model] + [max(fi, fo) for fi, fo in dims])

    def footprint(tm):
        act = tm * max_dim * (2 + 4 + 4)                # bf16 h + f32 y/LN temps
        io = 2 * (2 * tm * d_model * 4) + tm * d_model * 2   # x/out dbl-buf + carry
        return 2 * per_layer_param_bytes + act + io

    headroom = 1.4
    tm = min(target_tm, ((rows + 7) // 8) * 8)
    tm = max(tm, 8)
    # Shrink the tile (not the limit) until the footprint fits the budget.
    while tm > 8 and headroom * footprint(tm) > vmem_budget:
        tm -= 8

    # v7x has 2 TensorCores: make sure the parallel row axis has >= 2 tiles.
    if ("7" in kind) and pl.cdiv(rows, tm) < 2 and rows >= 16:
        tm = max(8, (((rows + 1) // 2 + 7) // 8) * 8)

    vmem_limit = int(headroom * footprint(tm))
    vmem_limit = max(vmem_limit, 16 * 1024 * 1024)
    vmem_limit = min(vmem_limit, vmem_budget)
    return tm, vmem_limit, per_layer_param_bytes


@jax.jit
def residual_ffn_forward(x, params):
    """x: (..., d_model) f32 -> (..., d_model) f32."""
    orig_shape = x.shape
    d_model = orig_shape[-1]
    rows = 1
    for s in orig_shape[:-1]:
        rows *= s
    x2d = x.reshape(rows, d_model)

    num_layers = params["w"][0].shape[0]
    dims = [(w.shape[1], w.shape[2]) for w in params["w"]]
    tm, vmem_limit, per_layer_param_bytes = _select_tile_and_vmem(rows, d_model, dims)

    # Pad rows to a multiple of tm with zeros (LN(eps) of a constant row is
    # finite, so padding never produces NaN); padded rows are discarded below.
    pad = (-rows) % tm
    if pad:
        x2d = jnp.pad(x2d, ((0, pad), (0, 0)))
    rows_p = rows + pad
    grid = (rows_p // tm, num_layers)

    flat_params = []
    in_specs = [pl.BlockSpec((tm, d_model), lambda i, l: (i, 0))]
    for k in range(NUM_MATMULS):
        w, p = params["w"][k], params["p"][k]
        fi, fo = w.shape[1], w.shape[2]
        flat_params += [w, p]
        in_specs += [
            pl.BlockSpec((None, fi, fo), lambda i, l: (l, 0, 0)),
            pl.BlockSpec((None, 3, fo), lambda i, l: (l, 0, 0)),
        ]
    out_spec = pl.BlockSpec((tm, d_model), lambda i, l: (i, 0))

    flops = 2 * rows * num_layers * sum(fi * fo for fi, fo in dims)
    transcendentals = rows * num_layers * NUM_MATMULS           # rsqrt per LN row
    bytes_accessed = (grid[0] * num_layers * per_layer_param_bytes
                      + 2 * rows * d_model * 4)
    try:
        cost = pl.CostEstimate(flops=flops, transcendentals=transcendentals,
                               bytes_accessed=bytes_accessed)
    except Exception:
        cost = None

    out = pl.pallas_call(
        rff_kernel,
        out_shape=jax.ShapeDtypeStruct((rows_p, d_model), x.dtype),
        grid_spec=pltpu.PrefetchScalarGridSpec(
            num_scalar_prefetch=0,
            grid=grid,
            in_specs=in_specs,
            out_specs=out_spec,
            scratch_shapes=[pltpu.VMEM((tm, d_model), jnp.bfloat16)],
        ),
        compiler_params=pltpu.CompilerParams(
            dimension_semantics=("parallel", "arbitrary"),
            vmem_limit_bytes=vmem_limit,
        ),
        cost_estimate=cost,
    )(x2d, *flat_params)

    return out[:rows].reshape(orig_shape)


def init_params(key, d_model, hidden_dim, num_layers):
    """Synthetic params: weights (L, in, out) bf16; packed [b;gamma;beta] f32."""
    dims = _layer_dims(d_model, hidden_dim)
    keys = jax.random.split(key, 4 * len(dims))
    ws, ps = [], []
    for k, (fi, fo) in enumerate(dims):
        kw, kb, kg, kbe = keys[4 * k: 4 * k + 4]
        w = (jax.random.normal(kw, (num_layers, fi, fo), jnp.float32)
             / jnp.sqrt(float(fi))).astype(jnp.bfloat16)
        b = 0.01 * jax.random.normal(kb, (num_layers, 1, fo), jnp.float32)
        g = 1.0 + 0.05 * jax.random.normal(kg, (num_layers, 1, fo), jnp.float32)
        be = 0.02 * jax.random.normal(kbe, (num_layers, 1, fo), jnp.float32)
        ws.append(w)
        ps.append(jnp.concatenate([b, g, be], axis=1))   # (L, 3, fo) f32
    return {"w": tuple(ws), "p": tuple(ps)}


def reference_forward(x, params):
    """Pure-JAX reference mirroring the kernel numerics (bf16 MXU inputs,
    f32 accumulation / LayerNorm, bf16 activation carry)."""
    orig_shape = x.shape
    d_model = orig_shape[-1]
    x2d = x.reshape(-1, d_model).astype(jnp.float32)
    num_layers = params["w"][0].shape[0]

    h_carry = x2d.astype(jnp.bfloat16)
    for l in range(num_layers):
        h = h_carry
        for k in range(NUM_MATMULS):
            w = params["w"][k][l]
            p = params["p"][k][l]
            y = jnp.dot(h, w, preferred_element_type=jnp.float32) + p[0:1, :]
            if k < NUM_MATMULS - 1:
                y = jnp.maximum(y, 0.0)
            h = _layer_norm(y, p[1:2, :], p[2:3, :]).astype(jnp.bfloat16)
        h_carry = h
    return (h_carry.astype(jnp.float32) + x2d).reshape(orig_shape)


if __name__ == "__main__":
    # Small shapes consistent with the module's forward (x: (batch, seq, d_model)).
    batch, seq, d_model = 2, 8, 32
    hidden_dim = 16        # stand-in for the default 1024*16
    num_layers = 2         # stand-in for the default 90/96

    key = jax.random.PRNGKey(0)
    kx, kp = jax.random.split(key)
    x = jax.random.normal(kx, (batch, seq, d_model), jnp.float32)
    params = init_params(kp, d_model, hidden_dim, num_layers)

    out = residual_ffn_forward(x, params)
    out = jax.block_until_ready(out)

    assert out.shape == (batch, seq, d_model)
    ref = reference_forward(x, params)
    max_err = float(jnp.max(jnp.abs(out - ref)))
    assert jnp.allclose(out, ref, atol=2e-2, rtol=2e-2), f"mismatch vs reference: {max_err}"

    print("KERNEL_OK")
</pallas_src>

<mosaic_0001>
module attributes {stable_mosaic.version = 11 : i64} {
  func.func @rff_kernel(%arg0: i32, %arg1: i32, %arg2: memref<16x32xf32, #tpu.memory_space<vmem>>, %arg3: memref<1x32x128xbf16, #tpu.memory_space<vmem>>, %arg4: memref<1x3x128xf32, #tpu.memory_space<vmem>>, %arg5: memref<1x128x64xbf16, #tpu.memory_space<vmem>>, %arg6: memref<1x3x64xf32, #tpu.memory_space<vmem>>, %arg7: memref<1x64x32xbf16, #tpu.memory_space<vmem>>, %arg8: memref<1x3x32xf32, #tpu.memory_space<vmem>>, %arg9: memref<1x32x256xbf16, #tpu.memory_space<vmem>>, %arg10: memref<1x3x256xf32, #tpu.memory_space<vmem>>, %arg11: memref<1x256x128xbf16, #tpu.memory_space<vmem>>, %arg12: memref<1x3x128xf32, #tpu.memory_space<vmem>>, %arg13: memref<1x128x64xbf16, #tpu.memory_space<vmem>>, %arg14: memref<1x3x64xf32, #tpu.memory_space<vmem>>, %arg15: memref<1x64x32xbf16, #tpu.memory_space<vmem>>, %arg16: memref<1x3x32xf32, #tpu.memory_space<vmem>>, %arg17: memref<16x32xf32, #tpu.memory_space<vmem>>, %arg18: memref<16x32xbf16, #tpu.memory_space<vmem>>) attributes {dimension_semantics = [#tpu.dimension_semantics<parallel>, #tpu.dimension_semantics<arbitrary>], iteration_bounds = array<i64: 1, 2>, scalar_prefetch = 0 : i64, scratch_operands = 1 : i64, tpu.core_type = #tpu.core_type<tc>, window_params = [{transform_indices = @transform_0, window_bounds = array<i64: 16, 32>}, {transform_indices = @transform_1, window_bounds = array<i64: 1, 32, 128>}, {transform_indices = @transform_2, window_bounds = array<i64: 1, 3, 128>}, {transform_indices = @transform_3, window_bounds = array<i64: 1, 128, 64>}, {transform_indices = @transform_4, window_bounds = array<i64: 1, 3, 64>}, {transform_indices = @transform_5, window_bounds = array<i64: 1, 64, 32>}, {transform_indices = @transform_6, window_bounds = array<i64: 1, 3, 32>}, {transform_indices = @transform_7, window_bounds = array<i64: 1, 32, 256>}, {transform_indices = @transform_8, window_bounds = array<i64: 1, 3, 256>}, {transform_indices = @transform_9, window_bounds = array<i64: 1, 256, 128>}, {transform_indices = @transform_10, window_bounds = array<i64: 1, 3, 128>}, {transform_indices = @transform_11, window_bounds = array<i64: 1, 128, 64>}, {transform_indices = @transform_12, window_bounds = array<i64: 1, 3, 64>}, {transform_indices = @transform_13, window_bounds = array<i64: 1, 64, 32>}, {transform_indices = @transform_14, window_bounds = array<i64: 1, 3, 32>}, {transform_indices = @transform_15, window_bounds = array<i64: 16, 32>}]} {
    %c0_i32 = arith.constant 0 : i32
    %0 = arith.cmpi eq, %arg1, %c0_i32 : i32
    %1 = arith.extui %0 : i1 to i32
    %c0_i32_0 = arith.constant 0 : i32
    %2 = arith.cmpi ne, %1, %c0_i32_0 : i32
    scf.if %2 {
      %c0_94 = arith.constant 0 : index
      %c0_95 = arith.constant 0 : index
      %239 = vector.load %arg2[%c0_94, %c0_95] : memref<16x32xf32, #tpu.memory_space<vmem>>, vector<16x32xf32>
      %240 = arith.truncf %239 : vector<16x32xf32> to vector<16x32xbf16>
      %c0_96 = arith.constant 0 : index
      %c0_97 = arith.constant 0 : index
      %241 = vector.load %arg18[%c0_96, %c0_97] : memref<16x32xbf16, #tpu.memory_space<vmem>>, vector<16x32xbf16>
      tpu.vector_store %arg18[%c0_96, %c0_97], %240 {strides = array<i32>} : memref<16x32xbf16, #tpu.memory_space<vmem>>, vector<16x32xbf16>,
    } else {
    }
    %c0 = arith.constant 0 : index
    %c0_1 = arith.constant 0 : index
    %3 = vector.load %arg18[%c0, %c0_1] : memref<16x32xbf16, #tpu.memory_space<vmem>>, vector<16x32xbf16>
    %c0_2 = arith.constant 0 : index
    %c0_3 = arith.constant 0 : index
    %c0_4 = arith.constant 0 : index
    %4 = vector.load %arg4[%c0_2, %c0_3, %c0_4] : memref<1x3x128xf32, #tpu.memory_space<vmem>>, vector<1x3x128xf32>
    %5 = vector.shape_cast %4 : vector<1x3x128xf32> to vector<3x128xf32>
    %c0_5 = arith.constant 0 : index
    %c0_6 = arith.constant 0 : index
    %c0_7 = arith.constant 0 : index
    %6 = vector.load %arg3[%c0_5, %c0_6, %c0_7] : memref<1x32x128xbf16, #tpu.memory_space<vmem>>, vector<1x32x128xbf16>
    %7 = vector.shape_cast %6 : vector<1x32x128xbf16> to vector<32x128xbf16>
    %cst = arith.constant dense<0.000000e+00> : vector<16x128xf32>
    %8 = tpu.matmul %3, %7, %cst {dimension_numbers = #tpu.dot_dimension_numbers<[1], [0], [0], [1], [0, 0, 1, 1], [], []>} : vector<16x32xbf16>, vector<32x128xbf16>, vector<16x128xf32> -> vector<16x128xf32>
    %9 = vector.extract_strided_slice %5 {offsets = [0, 0], sizes = [1, 128], strides = [1, 1]} : vector<3x128xf32> to vector<1x128xf32>
    %10 = vector.broadcast %9 : vector<1x128xf32> to vector<16x128xf32>
    %11 = arith.addf %8, %10 : vector<16x128xf32>
    %cst_8 = arith.constant 0.000000e+00 : f32
    %12 = vector.broadcast %cst_8 : f32 to vector<16x128xf32>
    %13 = arith.maximumf %11, %12 : vector<16x128xf32>
    %14 = vector.extract_strided_slice %5 {offsets = [1, 0], sizes = [1, 128], strides = [1, 1]} : vector<3x128xf32> to vector<1x128xf32>
    %15 = vector.extract_strided_slice %5 {offsets = [2, 0], sizes = [1, 128], strides = [1, 1]} : vector<3x128xf32> to vector<1x128xf32>
    %cst_9 = arith.constant dense<0.000000e+00> : vector<16xf32>
    %16 = vector.multi_reduction <add>, %13, %cst_9 [1] : vector<16x128xf32> to vector<16xf32>
    %17 = vector.shape_cast %16 : vector<16xf32> to vector<16x1xf32>
    %cst_10 = arith.constant 1.280000e+02 : f32
    %18 = vector.broadcast %cst_10 : f32 to vector<16x1xf32>
    %19 = arith.divf %17, %18 : vector<16x1xf32>
    %20 = vector.broadcast %19 : vector<16x1xf32> to vector<16x128xf32>
    %21 = arith.subf %13, %20 : vector<16x128xf32>
    %22 = arith.mulf %21, %21 : vector<16x128xf32>
    %cst_11 = arith.constant dense<0.000000e+00> : vector<16xf32>
    %23 = vector.multi_reduction <add>, %22, %cst_11 [1] : vector<16x128xf32> to vector<16xf32>
    %24 = vector.shape_cast %23 : vector<16xf32> to vector<16x1xf32>
    %cst_12 = arith.constant 1.280000e+02 : f32
    %25 = vector.broadcast %cst_12 : f32 to vector<16x1xf32>
    %26 = arith.divf %24, %25 : vector<16x1xf32>
    %cst_13 = arith.constant 9.99999974E-6 : f32
    %27 = vector.broadcast %cst_13 : f32 to vector<16x1xf32>
    %28 = arith.addf %26, %27 : vector<16x1xf32>
    %29 = math.rsqrt %28 : vector<16x1xf32>
    %30 = vector.broadcast %29 : vector<16x1xf32> to vector<16x128xf32>
    %31 = arith.mulf %21, %30 : vector<16x128xf32>
    %32 = vector.broadcast %14 : vector<1x128xf32> to vector<16x128xf32>
    %33 = arith.mulf %31, %32 : vector<16x128xf32>
    %34 = vector.broadcast %15 : vector<1x128xf32> to vector<16x128xf32>
    %35 = arith.addf %33, %34 : vector<16x128xf32>
    %36 = arith.truncf %35 : vector<16x128xf32> to vector<16x128xbf16>
    %c0_14 = arith.constant 0 : index
    %c0_15 = arith.constant 0 : index
    %c0_16 = arith.constant 0 : index
    %37 = vector.load %arg6[%c0_14, %c0_15, %c0_16] : memref<1x3x64xf32, #tpu.memory_space<vmem>>, vector<1x3x64xf32>
    %38 = vector.shape_cast %37 : vector<1x3x64xf32> to vector<3x64xf32>
    %c0_17 = arith.constant 0 : index
    %c0_18 = arith.constant 0 : index
    %c0_19 = arith.constant 0 : index
    %39 = vector.load %arg5[%c0_17, %c0_18, %c0_19] : memref<1x128x64xbf16, #tpu.memory_space<vmem>>, vector<1x128x64xbf16>
    %40 = vector.shape_cast %39 : vector<1x128x64xbf16> to vector<128x64xbf16>
    %cst_20 = arith.constant dense<0.000000e+00> : vector<16x64xf32>
    %41 = tpu.matmul %36, %40, %cst_20 {dimension_numbers = #tpu.dot_dimension_numbers<[1], [0], [0], [1], [0, 0, 1, 1], [], []>} : vector<16x128xbf16>, vector<128x64xbf16>, vector<16x64xf32> -> vector<16x64xf32>
    %42 = vector.extract_strided_slice %38 {offsets = [0, 0], sizes = [1, 64], strides = [1, 1]} : vector<3x64xf32> to vector<1x64xf32>
    %43 = vector.broadcast %42 : vector<1x64xf32> to vector<16x64xf32>
    %44 = arith.addf %41, %43 : vector<16x64xf32>
    %cst_21 = arith.constant 0.000000e+00 : f32
    %45 = vector.broadcast %cst_21 : f32 to vector<16x64xf32>
    %46 = arith.maximumf %44, %45 : vector<16x64xf32>
    %47 = vector.extract_strided_slice %38 {offsets = [1, 0], sizes = [1, 64], strides = [1, 1]} : vector<3x64xf32> to vector<1x64xf32>
    %48 = vector.extract_strided_slice %38 {offsets = [2, 0], sizes = [1, 64], strides = [1, 1]} : vector<3x64xf32> to vector<1x64xf32>
    %cst_22 = arith.constant dense<0.000000e+00> : vector<16xf32>
    %49 = vector.multi_reduction <add>, %46, %cst_22 [1] : vector<16x64xf32> to vector<16xf32>
    %50 = vector.shape_cast %49 : vector<16xf32> to vector<16x1xf32>
    %cst_23 = arith.constant 6.400000e+01 : f32
    %51 = vector.broadcast %cst_23 : f32 to vector<16x1xf32>
    %52 = arith.divf %50, %51 : vector<16x1xf32>
    %53 = vector.broadcast %52 : vector<16x1xf32> to vector<16x64xf32>
    %54 = arith.subf %46, %53 : vector<16x64xf32>
    %55 = arith.mulf %54, %54 : vector<16x64xf32>
    %cst_24 = arith.constant dense<0.000000e+00> : vector<16xf32>
    %56 = vector.multi_reduction <add>, %55, %cst_24 [1] : vector<16x64xf32> to vector<16xf32>
    %57 = vector.shape_cast %56 : vector<16xf32> to vector<16x1xf32>
    %cst_25 = arith.constant 6.400000e+01 : f32
    %58 = vector.broadcast %cst_25 : f32 to vector<16x1xf32>
    %59 = arith.divf %57, %58 : vector<16x1xf32>
    %cst_26 = arith.constant 9.99999974E-6 : f32
    %60 = vector.broadcast %cst_26 : f32 to vector<16x1xf32>
    %61 = arith.addf %59, %60 : vector<16x1xf32>
    %62 = math.rsqrt %61 : vector<16x1xf32>
    %63 = vector.broadcast %62 : vector<16x1xf32> to vector<16x64xf32>
    %64 = arith.mulf %54, %63 : vector<16x64xf32>
    %65 = vector.broadcast %47 : vector<1x64xf32> to vector<16x64xf32>
    %66 = arith.mulf %64, %65 : vector<16x64xf32>
    %67 = vector.broadcast %48 : vector<1x64xf32> to vector<16x64xf32>
    %68 = arith.addf %66, %67 : vector<16x64xf32>
    %69 = arith.truncf %68 : vector<16x64xf32> to vector<16x64xbf16>
    %c0_27 = arith.constant 0 : index
    %c0_28 = arith.constant 0 : index
    %c0_29 = arith.constant 0 : index
    %70 = vector.load %arg8[%c0_27, %c0_28, %c0_29] : memref<1x3x32xf32, #tpu.memory_space<vmem>>, vector<1x3x32xf32>
    %71 = vector.shape_cast %70 : vector<1x3x32xf32> to vector<3x32xf32>
    %c0_30 = arith.constant 0 : index
    %c0_31 = arith.constant 0 : index
    %c0_32 = arith.constant 0 : index
    %72 = vector.load %arg7[%c0_30, %c0_31, %c0_32] : memref<1x64x32xbf16, #tpu.memory_space<vmem>>, vector<1x64x32xbf16>
    %73 = vector.shape_cast %72 : vector<1x64x32xbf16> to vector<64x32xbf16>
    %cst_33 = arith.constant dense<0.000000e+00> : vector<16x32xf32>
    %74 = tpu.matmul %69, %73, %cst_33 {dimension_numbers = #tpu.dot_dimension_numbers<[1], [0], [0], [1], [0, 0, 1, 1], [], []>} : vector<16x64xbf16>, vector<64x32xbf16>, vector<16x32xf32> -> vector<16x32xf32>
    %75 = vector.extract_strided_slice %71 {offsets = [0, 0], sizes = [1, 32], strides = [1, 1]} : vector<3x32xf32> to vector<1x32xf32>
    %76 = vector.broadcast %75 : vector<1x32xf32> to vector<16x32xf32>
    %77 = arith.addf %74, %76 : vector<16x32xf32>
    %cst_34 = arith.constant 0.000000e+00 : f32
    %78 = vector.broadcast %cst_34 : f32 to vector<16x32xf32>
    %79 = arith.maximumf %77, %78 : vector<16x32xf32>
    %80 = vector.extract_strided_slice %71 {offsets = [1, 0], sizes = [1, 32], strides = [1, 1]} : vector<3x32xf32> to vector<1x32xf32>
    %81 = vector.extract_strided_slice %71 {offsets = [2, 0], sizes = [1, 32], strides = [1, 1]} : vector<3x32xf32> to vector<1x32xf32>
    %cst_35 = arith.constant dense<0.000000e+00> : vector<16xf32>
    %82 = vector.multi_reduction <add>, %79, %cst_35 [1] : vector<16x32xf32> to vector<16xf32>
    %83 = vector.shape_cast %82 : vector<16xf32> to vector<16x1xf32>
    %cst_36 = arith.constant 3.200000e+01 : f32
    %84 = vector.broadcast %cst_36 : f32 to vector<16x1xf32>
    %85 = arith.divf %83, %84 : vector<16x1xf32>
    %86 = vector.broadcast %85 : vector<16x1xf32> to vector<16x32xf32>
    %87 = arith.subf %79, %86 : vector<16x32xf32>
    %88 = arith.mulf %87, %87 : vector<16x32xf32>
    %cst_37 = arith.constant dense<0.000000e+00> : vector<16xf32>
    %89 = vector.multi_reduction <add>, %88, %cst_37 [1] : vector<16x32xf32> to vector<16xf32>
    %90 = vector.shape_cast %89 : vector<16xf32> to vector<16x1xf32>
    %cst_38 = arith.constant 3.200000e+01 : f32
    %91 = vector.broadcast %cst_38 : f32 to vector<16x1xf32>
    %92 = arith.divf %90, %91 : vector<16x1xf32>
    %cst_39 = arith.constant 9.99999974E-6 : f32
    %93 = vector.broadcast %cst_39 : f32 to vector<16x1xf32>
    %94 = arith.addf %92, %93 : vector<16x1xf32>
    %95 = math.rsqrt %94 : vector<16x1xf32>
    %96 = vector.broadcast %95 : vector<16x1xf32> to vector<16x32xf32>
    %97 = arith.mulf %87, %96 : vector<16x32xf32>
    %98 = vector.broadcast %80 : vector<1x32xf32> to vector<16x32xf32>
    %99 = arith.mulf %97, %98 : vector<16x32xf32>
    %100 = vector.broadcast %81 : vector<1x32xf32> to vector<16x32xf32>
    %101 = arith.addf %99, %100 : vector<16x32xf32>
    %102 = arith.truncf %101 : vector<16x32xf32> to vector<16x32xbf16>
    %c0_40 = arith.constant 0 : index
    %c0_41 = arith.constant 0 : index
    %c0_42 = arith.constant 0 : index
    %103 = vector.load %arg10[%c0_40, %c0_41, %c0_42] : memref<1x3x256xf32, #tpu.memory_space<vmem>>, vector<1x3x256xf32>
    %104 = vector.shape_cast %103 : vector<1x3x256xf32> to vector<3x256xf32>
    %c0_43 = arith.constant 0 : index
    %c0_44 = arith.constant 0 : index
    %c0_45 = arith.constant 0 : index
    %105 = vector.load %arg9[%c0_43, %c0_44, %c0_45] : memref<1x32x256xbf16, #tpu.memory_space<vmem>>, vector<1x32x256xbf16>
    %106 = vector.shape_cast %105 : vector<1x32x256xbf16> to vector<32x256xbf16>
    %cst_46 = arith.constant dense<0.000000e+00> : vector<16x256xf32>
    %107 = tpu.matmul %102, %106, %cst_46 {dimension_numbers = #tpu.dot_dimension_numbers<[1], [0], [0], [1], [0, 0, 1, 1], [], []>} : vector<16x32xbf16>, vector<32x256xbf16>, vector<16x256xf32> -> vector<16x256xf32>
    %108 = vector.extract_strided_slice %104 {offsets = [0, 0], sizes = [1, 256], strides = [1, 1]} : vector<3x256xf32> to vector<1x256xf32>
    %109 = vector.broadcast %108 : vector<1x256xf32> to vector<16x256xf32>
    %110 = arith.addf %107, %109 : vector<16x256xf32>
    %cst_47 = arith.constant 0.000000e+00 : f32
    %111 = vector.broadcast %cst_47 : f32 to vector<16x256xf32>
    %112 = arith.maximumf %110, %111 : vector<16x256xf32>
    %113 = vector.extract_strided_slice %104 {offsets = [1, 0], sizes = [1, 256], strides = [1, 1]} : vector<3x256xf32> to vector<1x256xf32>
    %114 = vector.extract_strided_slice %104 {offsets = [2, 0], sizes = [1, 256], strides = [1, 1]} : vector<3x256xf32> to vector<1x256xf32>
    %cst_48 = arith.constant dense<0.000000e+00> : vector<16xf32>
    %115 = vector.multi_reduction <add>, %112, %cst_48 [1] : vector<16x256xf32> to vector<16xf32>
    %116 = vector.shape_cast %115 : vector<16xf32> to vector<16x1xf32>
    %cst_49 = arith.constant 2.560000e+02 : f32
    %117 = vector.broadcast %cst_49 : f32 to vector<16x1xf32>
    %118 = arith.divf %116, %117 : vector<16x1xf32>
    %119 = vector.broadcast %118 : vector<16x1xf32> to vector<16x256xf32>
    %120 = arith.subf %112, %119 : vector<16x256xf32>
    %121 = arith.mulf %120, %120 : vector<16x256xf32>
    %cst_50 = arith.constant dense<0.000000e+00> : vector<16xf32>
    %122 = vector.multi_reduction <add>, %121, %cst_50 [1] : vector<16x256xf32> to vector<16xf32>
    %123 = vector.shape_cast %122 : vector<16xf32> to vector<16x1xf32>
    %cst_51 = arith.constant 2.560000e+02 : f32
    %124 = vector.broadcast %cst_51 : f32 to vector<16x1xf32>
    %125 = arith.divf %123, %124 : vector<16x1xf32>
    %cst_52 = arith.constant 9.99999974E-6 : f32
    %126 = vector.broadcast %cst_52 : f32 to vector<16x1xf32>
    %127 = arith.addf %125, %126 : vector<16x1xf32>
    %128 = math.rsqrt %127 : vector<16x1xf32>
    %129 = vector.broadcast %128 : vector<16x1xf32> to vector<16x256xf32>
    %130 = arith.mulf %120, %129 : vector<16x256xf32>
    %131 = vector.broadcast %113 : vector<1x256xf32> to vector<16x256xf32>
    %132 = arith.mulf %130, %131 : vector<16x256xf32>
    %133 = vector.broadcast %114 : vector<1x256xf32> to vector<16x256xf32>
    %134 = arith.addf %132, %133 : vector<16x256xf32>
    %135 = arith.truncf %134 : vector<16x256xf32> to vector<16x256xbf16>
    %c0_53 = arith.constant 0 : index
    %c0_54 = arith.constant 0 : index
    %c0_55 = arith.constant 0 : index
    %136 = vector.load %arg12[%c0_53, %c0_54, %c0_55] : memref<1x3x128xf32, #tpu.memory_space<vmem>>, vector<1x3x128xf32>
    %137 = vector.shape_cast %136 : vector<1x3x128xf32> to vector<3x128xf32>
    %c0_56 = arith.constant 0 : index
    %c0_57 = arith.constant 0 : index
    %c0_58 = arith.constant 0 : index
    %138 = vector.load %arg11[%c0_56, %c0_57, %c0_58] : memref<1x256x128xbf16, #tpu.memory_space<vmem>>, vector<1x256x128xbf16>
    %139 = vector.shape_cast %138 : vector<1x256x128xbf16> to vector<256x128xbf16>
    %cst_59 = arith.constant dense<0.000000e+00> : vector<16x128xf32>
    %140 = tpu.matmul %135, %139, %cst_59 {dimension_numbers = #tpu.dot_dimension_numbers<[1], [0], [0], [1], [0, 0, 1, 1], [], []>} : vector<16x256xbf16>, vector<256x128xbf16>, vector<16x128xf32> -> vector<16x128xf32>
    %141 = vector.extract_strided_slice %137 {offsets = [0, 0], sizes = [1, 128], strides = [1, 1]} : vector<3x128xf32> to vector<1x128xf32>
    %142 = vector.broadcast %141 : vector<1x128xf32> to vector<16x128xf32>
    %143 = arith.addf %140, %142 : vector<16x128xf32>
    %cst_60 = arith.constant 0.000000e+00 : f32
    %144 = vector.broadcast %cst_60 : f32 to vector<16x128xf32>
    %145 = arith.maximumf %143, %144 : vector<16x128xf32>
    %146 = vector.extract_strided_slice %137 {offsets = [1, 0], sizes = [1, 128], strides = [1, 1]} : vector<3x128xf32> to vector<1x128xf32>
    %147 = vector.extract_strided_slice %137 {offsets = [2, 0], sizes = [1, 128], strides = [1, 1]} : vector<3x128xf32> to vector<1x128xf32>
    %cst_61 = arith.constant dense<0.000000e+00> : vector<16xf32>
    %148 = vector.multi_reduction <add>, %145, %cst_61 [1] : vector<16x128xf32> to vector<16xf32>
    %149 = vector.shape_cast %148 : vector<16xf32> to vector<16x1xf32>
    %cst_62 = arith.constant 1.280000e+02 : f32
    %150 = vector.broadcast %cst_62 : f32 to vector<16x1xf32>
    %151 = arith.divf %149, %150 : vector<16x1xf32>
    %152 = vector.broadcast %151 : vector<16x1xf32> to vector<16x128xf32>
    %153 = arith.subf %145, %152 : vector<16x128xf32>
    %154 = arith.mulf %153, %153 : vector<16x128xf32>
    %cst_63 = arith.constant dense<0.000000e+00> : vector<16xf32>
    %155 = vector.multi_reduction <add>, %154, %cst_63 [1] : vector<16x128xf32> to vector<16xf32>
    %156 = vector.shape_cast %155 : vector<16xf32> to vector<16x1xf32>
    %cst_64 = arith.constant 1.280000e+02 : f32
    %157 = vector.broadcast %cst_64 : f32 to vector<16x1xf32>
    %158 = arith.divf %156, %157 : vector<16x1xf32>
    %cst_65 = arith.constant 9.99999974E-6 : f32
    %159 = vector.broadcast %cst_65 : f32 to vector<16x1xf32>
    %160 = arith.addf %158, %159 : vector<16x1xf32>
    %161 = math.rsqrt %160 : vector<16x1xf32>
    %162 = vector.broadcast %161 : vector<16x1xf32> to vector<16x128xf32>
    %163 = arith.mulf %153, %162 : vector<16x128xf32>
    %164 = vector.broadcast %146 : vector<1x128xf32> to vector<16x128xf32>
    %165 = arith.mulf %163, %164 : vector<16x128xf32>
    %166 = vector.broadcast %147 : vector<1x128xf32> to vector<16x128xf32>
    %167 = arith.addf %165, %166 : vector<16x128xf32>
    %168 = arith.truncf %167 : vector<16x128xf32> to vector<16x128xbf16>
    %c0_66 = arith.constant 0 : index
    %c0_67 = arith.constant 0 : index
    %c0_68 = arith.constant 0 : index
    %169 = vector.load %arg14[%c0_66, %c0_67, %c0_68] : memref<1x3x64xf32, #tpu.memory_space<vmem>>, vector<1x3x64xf32>
    %170 = vector.shape_cast %169 : vector<1x3x64xf32> to vector<3x64xf32>
    %c0_69 = arith.constant 0 : index
    %c0_70 = arith.constant 0 : index
    %c0_71 = arith.constant 0 : index
    %171 = vector.load %arg13[%c0_69, %c0_70, %c0_71] : memref<1x128x64xbf16, #tpu.memory_space<vmem>>, vector<1x128x64xbf16>
    %172 = vector.shape_cast %171 : vector<1x128x64xbf16> to vector<128x64xbf16>
    %cst_72 = arith.constant dense<0.000000e+00> : vector<16x64xf32>
    %173 = tpu.matmul %168, %172, %cst_72 {dimension_numbers = #tpu.dot_dimension_numbers<[1], [0], [0], [1], [0, 0, 1, 1], [], []>} : vector<16x128xbf16>, vector<128x64xbf16>, vector<16x64xf32> -> vector<16x64xf32>
    %174 = vector.extract_strided_slice %170 {offsets = [0, 0], sizes = [1, 64], strides = [1, 1]} : vector<3x64xf32> to vector<1x64xf32>
    %175 = vector.broadcast %174 : vector<1x64xf32> to vector<16x64xf32>
    %176 = arith.addf %173, %175 : vector<16x64xf32>
    %cst_73 = arith.constant 0.000000e+00 : f32
    %177 = vector.broadcast %cst_73 : f32 to vector<16x64xf32>
    %178 = arith.maximumf %176, %177 : vector<16x64xf32>
    %179 = vector.extract_strided_slice %170 {offsets = [1, 0], sizes = [1, 64], strides = [1, 1]} : vector<3x64xf32> to vector<1x64xf32>
    %180 = vector.extract_strided_slice %170 {offsets = [2, 0], sizes = [1, 64], strides = [1, 1]} : vector<3x64xf32> to vector<1x64xf32>
    %cst_74 = arith.constant dense<0.000000e+00> : vector<16xf32>
    %181 = vector.multi_reduction <add>, %178, %cst_74 [1] : vector<16x64xf32> to vector<16xf32>
    %182 = vector.shape_cast %181 : vector<16xf32> to vector<16x1xf32>
    %cst_75 = arith.constant 6.400000e+01 : f32
    %183 = vector.broadcast %cst_75 : f32 to vector<16x1xf32>
    %184 = arith.divf %182, %183 : vector<16x1xf32>
    %185 = vector.broadcast %184 : vector<16x1xf32> to vector<16x64xf32>
    %186 = arith.subf %178, %185 : vector<16x64xf32>
    %187 = arith.mulf %186, %186 : vector<16x64xf32>
    %cst_76 = arith.constant dense<0.000000e+00> : vector<16xf32>
    %188 = vector.multi_reduction <add>, %187, %cst_76 [1] : vector<16x64xf32> to vector<16xf32>
    %189 = vector.shape_cast %188 : vector<16xf32> to vector<16x1xf32>
    %cst_77 = arith.constant 6.400000e+01 : f32
    %190 = vector.broadcast %cst_77 : f32 to vector<16x1xf32>
    %191 = arith.divf %189, %190 : vector<16x1xf32>
    %cst_78 = arith.constant 9.99999974E-6 : f32
    %192 = vector.broadcast %cst_78 : f32 to vector<16x1xf32>
    %193 = arith.addf %191, %192 : vector<16x1xf32>
    %194 = math.rsqrt %193 : vector<16x1xf32>
    %195 = vector.broadcast %194 : vector<16x1xf32> to vector<16x64xf32>
    %196 = arith.mulf %186, %195 : vector<16x64xf32>
    %197 = vector.broadcast %179 : vector<1x64xf32> to vector<16x64xf32>
    %198 = arith.mulf %196, %197 : vector<16x64xf32>
    %199 = vector.broadcast %180 : vector<1x64xf32> to vector<16x64xf32>
    %200 = arith.addf %198, %199 : vector<16x64xf32>
    %201 = arith.truncf %200 : vector<16x64xf32> to vector<16x64xbf16>
    %c0_79 = arith.constant 0 : index
    %c0_80 = arith.constant 0 : index
    %c0_81 = arith.constant 0 : index
    %202 = vector.load %arg16[%c0_79, %c0_80, %c0_81] : memref<1x3x32xf32, #tpu.memory_space<vmem>>, vector<1x3x32xf32>
    %203 = vector.shape_cast %202 : vector<1x3x32xf32> to vector<3x32xf32>
    %c0_82 = arith.constant 0 : index
    %c0_83 = arith.constant 0 : index
    %c0_84 = arith.constant 0 : index
    %204 = vector.load %arg15[%c0_82, %c0_83, %c0_84] : memref<1x64x32xbf16, #tpu.memory_space<vmem>>, vector<1x64x32xbf16>
    %205 = vector.shape_cast %204 : vector<1x64x32xbf16> to vector<64x32xbf16>
    %cst_85 = arith.constant dense<0.000000e+00> : vector<16x32xf32>
    %206 = tpu.matmul %201, %205, %cst_85 {dimension_numbers = #tpu.dot_dimension_numbers<[1], [0], [0], [1], [0, 0, 1, 1], [], []>} : vector<16x64xbf16>, vector<64x32xbf16>, vector<16x32xf32> -> vector<16x32xf32>
    %207 = vector.extract_strided_slice %203 {offsets = [0, 0], sizes = [1, 32], strides = [1, 1]} : vector<3x32xf32> to vector<1x32xf32>
    %208 = vector.broadcast %207 : vector<1x32xf32> to vector<16x32xf32>
    %209 = arith.addf %206, %208 : vector<16x32xf32>
    %210 = vector.extract_strided_slice %203 {offsets = [1, 0], sizes = [1, 32], strides = [1, 1]} : vector<3x32xf32> to vector<1x32xf32>
    %211 = vector.extract_strided_slice %203 {offsets = [2, 0], sizes = [1, 32], strides = [1, 1]} : vector<3x32xf32> to vector<1x32xf32>
    %cst_86 = arith.constant dense<0.000000e+00> : vector<16xf32>
    %212 = vector.multi_reduction <add>, %209, %cst_86 [1] : vector<16x32xf32> to vector<16xf32>
    %213 = vector.shape_cast %212 : vector<16xf32> to vector<16x1xf32>
    %cst_87 = arith.constant 3.200000e+01 : f32
    %214 = vector.broadcast %cst_87 : f32 to vector<16x1xf32>
    %215 = arith.divf %213, %214 : vector<16x1xf32>
    %216 = vector.broadcast %215 : vector<16x1xf32> to vector<16x32xf32>
    %217 = arith.subf %209, %216 : vector<16x32xf32>
    %218 = arith.mulf %217, %217 : vector<16x32xf32>
    %cst_88 = arith.constant dense<0.000000e+00> : vector<16xf32>
    %219 = vector.multi_reduction <add>, %218, %cst_88 [1] : vector<16x32xf32> to vector<16xf32>
    %220 = vector.shape_cast %219 : vector<16xf32> to vector<16x1xf32>
    %cst_89 = arith.constant 3.200000e+01 : f32
    %221 = vector.broadcast %cst_89 : f32 to vector<16x1xf32>
    %222 = arith.divf %220, %221 : vector<16x1xf32>
    %cst_90 = arith.constant 9.99999974E-6 : f32
    %223 = vector.broadcast %cst_90 : f32 to vector<16x1xf32>
    %224 = arith.addf %222, %223 : vector<16x1xf32>
    %225 = math.rsqrt %224 : vector<16x1xf32>
    %226 = vector.broadcast %225 : vector<16x1xf32> to vector<16x32xf32>
    %227 = arith.mulf %217, %226 : vector<16x32xf32>
    %228 = vector.broadcast %210 : vector<1x32xf32> to vector<16x32xf32>
    %229 = arith.mulf %227, %228 : vector<16x32xf32>
    %230 = vector.broadcast %211 : vector<1x32xf32> to vector<16x32xf32>
    %231 = arith.addf %229, %230 : vector<16x32xf32>
    %232 = arith.truncf %231 : vector<16x32xf32> to vector<16x32xbf16>
    %c1_i32 = arith.constant 1 : i32
    %233 = arith.cmpi ne, %arg1, %c1_i32 : i32
    %234 = arith.extui %233 : i1 to i32
    %c0_i32_91 = arith.constant 0 : i32
    %235 = arith.cmpi ne, %234, %c0_i32_91 : i32
    scf.if %235 {
      %c0_94 = arith.constant 0 : index
      %c0_95 = arith.constant 0 : index
      %239 = vector.load %arg18[%c0_94, %c0_95] : memref<16x32xbf16, #tpu.memory_space<vmem>>, vector<16x32xbf16>
      tpu.vector_store %arg18[%c0_94, %c0_95], %232 {strides = array<i32>} : memref<16x32xbf16, #tpu.memory_space<vmem>>, vector<16x32xbf16>,
    } else {
    }
    %c1_i32_92 = arith.constant 1 : i32
    %236 = arith.cmpi eq, %arg1, %c1_i32_92 : i32
    %237 = arith.extui %236 : i1 to i32
    %c0_i32_93 = arith.constant 0 : i32
    %238 = arith.cmpi ne, %237, %c0_i32_93 : i32
    scf.if %238 {
      %239 = arith.extf %232 : vector<16x32xbf16> to vector<16x32xf32>
      %c0_94 = arith.constant 0 : index
      %c0_95 = arith.constant 0 : index
      %240 = vector.load %arg2[%c0_94, %c0_95] : memref<16x32xf32, #tpu.memory_space<vmem>>, vector<16x32xf32>
      %241 = arith.addf %239, %240 : vector<16x32xf32>
      %c0_96 = arith.constant 0 : index
      %c0_97 = arith.constant 0 : index
      %242 = vector.load %arg17[%c0_96, %c0_97] : memref<16x32xf32, #tpu.memory_space<vmem>>, vector<16x32xf32>
      tpu.vector_store %arg17[%c0_96, %c0_97], %241 {strides = array<i32>} : memref<16x32xf32, #tpu.memory_space<vmem>>, vector<16x32xf32>,
    } else {
    }
    return
  }
  func.func @transform_0(%arg0: i32, %arg1: i32) -> (i32, i32) {
    %c0_i32 = arith.constant 0 : i32
    %c0_i32_0 = arith.constant 0 : i32
    return %arg0, %c0_i32 : i32, i32
  }
  func.func @transform_1(%arg0: i32, %arg1: i32) -> (i32, i32, i32) {
    %c0_i32 = arith.constant 0 : i32
    %c0_i32_0 = arith.constant 0 : i32
    %c0_i32_1 = arith.constant 0 : i32
    return %arg1, %c0_i32, %c0_i32_0 : i32, i32, i32
  }
  func.func @transform_2(%arg0: i32, %arg1: i32) -> (i32, i32, i32) {
    %c0_i32 = arith.constant 0 : i32
    %c0_i32_0 = arith.constant 0 : i32
    %c0_i32_1 = arith.constant 0 : i32
    return %arg1, %c0_i32, %c0_i32_0 : i32, i32, i32
  }
  func.func @transform_3(%arg0: i32, %arg1: i32) -> (i32, i32, i32) {
    %c0_i32 = arith.constant 0 : i32
    %c0_i32_0 = arith.constant 0 : i32
    %c0_i32_1 = arith.constant 0 : i32
    return %arg1, %c0_i32, %c0_i32_0 : i32, i32, i32
  }
  func.func @transform_4(%arg0: i32, %arg1: i32) -> (i32, i32, i32) {
    %c0_i32 = arith.constant 0 : i32
    %c0_i32_0 = arith.constant 0 : i32
    %c0_i32_1 = arith.constant 0 : i32
    return %arg1, %c0_i32, %c0_i32_0 : i32, i32, i32
  }
  func.func @transform_5(%arg0: i32, %arg1: i32) -> (i32, i32, i32) {
    %c0_i32 = arith.constant 0 : i32
    %c0_i32_0 = arith.constant 0 : i32
    %c0_i32_1 = arith.constant 0 : i32
    return %arg1, %c0_i32, %c0_i32_0 : i32, i32, i32
  }
  func.func @transform_6(%arg0: i32, %arg1: i32) -> (i32, i32, i32) {
    %c0_i32 = arith.constant 0 : i32
    %c0_i32_0 = arith.constant 0 : i32
    %c0_i32_1 = arith.constant 0 : i32
    return %arg1, %c0_i32, %c0_i32_0 : i32, i32, i32
  }
  func.func @transform_7(%arg0: i32, %arg1: i32) -> (i32, i32, i32) {
    %c0_i32 = arith.constant 0 : i32
    %c0_i32_0 = arith.constant 0 : i32
    %c0_i32_1 = arith.constant 0 : i32
    return %arg1, %c0_i32, %c0_i32_0 : i32, i32, i32
  }
  func.func @transform_8(%arg0: i32, %arg1: i32) -> (i32, i32, i32) {
    %c0_i32 = arith.constant 0 : i32
    %c0_i32_0 = arith.constant 0 : i32
    %c0_i32_1 = arith.constant 0 : i32
    return %arg1, %c0_i32, %c0_i32_0 : i32, i32, i32
  }
  func.func @transform_9(%arg0: i32, %arg1: i32) -> (i32, i32, i32) {
    %c0_i32 = arith.constant 0 : i32
    %c0_i32_0 = arith.constant 0 : i32
    %c0_i32_1 = arith.constant 0 : i32
    return %arg1, %c0_i32, %c0_i32_0 : i32, i32, i32
  }
  func.func @transform_10(%arg0: i32, %arg1: i32) -> (i32, i32, i32) {
    %c0_i32 = arith.constant 0 : i32
    %c0_i32_0 = arith.constant 0 : i32
    %c0_i32_1 = arith.constant 0 : i32
    return %arg1, %c0_i32, %c0_i32_0 : i32, i32, i32
  }
  func.func @transform_11(%arg0: i32, %arg1: i32) -> (i32, i32, i32) {
    %c0_i32 = arith.constant 0 : i32
    %c0_i32_0 = arith.constant 0 : i32
    %c0_i32_1 = arith.constant 0 : i32
    return %arg1, %c0_i32, %c0_i32_0 : i32, i32, i32
  }
  func.func @transform_12(%arg0: i32, %arg1: i32) -> (i32, i32, i32) {
    %c0_i32 = arith.constant 0 : i32
    %c0_i32_0 = arith.constant 0 : i32
    %c0_i32_1 = arith.constant 0 : i32
    return %arg1, %c0_i32, %c0_i32_0 : i32, i32, i32
  }
  func.func @transform_13(%arg0: i32, %arg1: i32) -> (i32, i32, i32) {
    %c0_i32 = arith.constant 0 : i32
    %c0_i32_0 = arith.constant 0 : i32
    %c0_i32_1 = arith.constant 0 : i32
    return %arg1, %c0_i32, %c0_i32_0 : i32, i32, i32
  }
  func.func @transform_14(%arg0: i32, %arg1: i32) -> (i32, i32, i32) {
    %c0_i32 = arith.constant 0 : i32
    %c0_i32_0 = arith.constant 0 : i32
    %c0_i32_1 = arith.constant 0 : i32
    return %arg1, %c0_i32, %c0_i32_0 : i32, i32, i32
  }
  func.func @transform_15(%arg0: i32, %arg1: i32) -> (i32, i32) {
    %c0_i32 = arith.constant 0 : i32
    %c0_i32_0 = arith.constant 0 : i32
    return %arg0, %c0_i32 : i32, i32
  }
}

</mosaic_0001>

<llo_original>
// kernel: residual_ffn_forward.1
$region0: #{residual_ffn_forward.1}
  #allocation0 [shape = 'u32[]', space=smem, size = 0x4, offset = 0x4, fixed_abs, tag = 'smem constant byte address 0x4 - core index']
  #allocation1 [shape = 'u32[72,128]{1,0:T(1,128)}', space=vmem, size = 0x9000, scoped, tag = 'internal scratch']
  #allocation2 [shape = 'bf16[16,32]{1,0:T(8,128)(2,1)}', space=vmem, size = 0x1000, scoped, tag = 'scratch operand']
  %s0 = inlined_call_operand.vmem [shape: f32[16,32], index: 0, kind: input, shape index: {}]
  %s1 = inlined_call_operand.vmem [shape: bf16[2,32,128], index: 1, kind: input, shape index: {}]
  %s2 = inlined_call_operand.vmem [shape: f32[2,3,128], index: 2, kind: input, shape index: {}]
  %s3 = inlined_call_operand.vmem [shape: bf16[2,128,64], index: 3, kind: input, shape index: {}]
  %s4 = inlined_call_operand.vmem [shape: f32[2,3,64], index: 4, kind: input, shape index: {}]
  %s5 = inlined_call_operand.vmem [shape: bf16[2,64,32], index: 5, kind: input, shape index: {}]
  %s6 = inlined_call_operand.vmem [shape: f32[2,3,32], index: 6, kind: input, shape index: {}]
  %s7 = inlined_call_operand.vmem [shape: bf16[2,32,256], index: 7, kind: input, shape index: {}]
  %s8 = inlined_call_operand.vmem [shape: f32[2,3,256], index: 8, kind: input, shape index: {}]
  %s9 = inlined_call_operand.vmem [shape: bf16[2,256,128], index: 9, kind: input, shape index: {}]
  %s10 = inlined_call_operand.vmem [shape: f32[2,3,128], index: 10, kind: input, shape index: {}]
  %s11 = inlined_call_operand.vmem [shape: bf16[2,128,64], index: 11, kind: input, shape index: {}]
  %s12 = inlined_call_operand.vmem [shape: f32[2,3,64], index: 12, kind: input, shape index: {}]
  %s13 = inlined_call_operand.vmem [shape: bf16[2,64,32], index: 13, kind: input, shape index: {}]
  %s14 = inlined_call_operand.vmem [shape: f32[2,3,32], index: 14, kind: input, shape index: {}]
  %s15 = inlined_call_operand.hbm [shape: f32[16,32], index: 15, kind: output, shape index: {}]
  %s16 = sld [smem:[#allocation0]]
  $region105: #{residual_ffn_forward.1} parent=0
    _
  %s18 = ssub.s32 1, %s16
  %s19 = scalar_select 0, %s18, %s16
  $region1: #{residual_ffn_forward.1} parent=0
    #allocation3 [shape = 'u8[8192]{0}', space=vmem, size = 0x2000, scoped, tag = 'output window, operand 0, single buffered']
    #allocation4 [shape = 's32[2]{0}', space=sflag, size = 0x8, scoped, tag = 'scoped memory for residual_ffn_forward.1']
    %20 = vsyncpa [#allocation4], 0
    loop: start=0, step=1, limit=4
    $region2: #{residual_ffn_forward.1} parent=1 // loop_pre_header
      _
    $region3: #{residual_ffn_forward.1} parent=1 // loop_header
      %s22 = sphi 0, %s26
      %p23 = scmp.ge.s32.totalorder %s22, 4
      %s29 = sphi 0, %s41
      %s30 = sphi 0, %s37
      %s31 = sphi 0, %s29
      %s32 = sphi 0, %s30
      %s33 = sphi 0, %s31
      %s34 = sphi 0, %s32
      %s44 = sphi 0, %s46
      %s47 = sphi 0, %s44
      %s48 = sphi 0, %s47
      %s64 = sphi 0, %s48
      %s70 = sphi 0, %s72
      %s73 = sphi 0, %s70
      %s74 = sphi 0, %s73
      %s90 = sphi 0, %s74
      %s96 = sphi 0, %s98
      %s99 = sphi 0, %s96
      %s100 = sphi 0, %s99
      %s116 = sphi 0, %s100
      %s122 = sphi 0, %s124
      %s125 = sphi 0, %s122
      %s126 = sphi 0, %s125
      %s142 = sphi 0, %s126
      %s148 = sphi 0, %s150
      %s151 = sphi 0, %s148
      %s152 = sphi 0, %s151
      %s168 = sphi 0, %s152
      %s174 = sphi 0, %s176
      %s177 = sphi 0, %s174
      %s178 = sphi 0, %s177
      %s194 = sphi 0, %s178
      %s200 = sphi 0, %s202
      %s203 = sphi 0, %s200
      %s204 = sphi 0, %s203
      %s220 = sphi 0, %s204
      %s226 = sphi 0, %s228
      %s229 = sphi 0, %s226
      %s230 = sphi 0, %s229
      %s246 = sphi 0, %s230
      %s252 = sphi 0, %s254
      %s255 = sphi 0, %s252
      %s256 = sphi 0, %s255
      %s272 = sphi 0, %s256
      %s278 = sphi 0, %s280
      %s281 = sphi 0, %s278
      %s282 = sphi 0, %s281
      %s298 = sphi 0, %s282
      %s304 = sphi 0, %s306
      %s307 = sphi 0, %s304
      %s308 = sphi 0, %s307
      %s324 = sphi 0, %s308
      %s330 = sphi 0, %s332
      %s333 = sphi 0, %s330
      %s334 = sphi 0, %s333
      %s350 = sphi 0, %s334
      %s356 = sphi 0, %s358
      %s359 = sphi 0, %s356
      %s360 = sphi 0, %s359
      %s376 = sphi 0, %s360
      %s382 = sphi 0, %s384
      %s385 = sphi 0, %s382
      %s386 = sphi 0, %s385
      %s402 = sphi 0, %s386
      %s408 = sphi 0, %s410
      %s411 = sphi 0, %s408
      %s412 = sphi 0, %s411
      %s428 = sphi 0, %s412
      %s434 = sphi 0, %s436
      %s437 = sphi 0, %s434
      %s438 = sphi 0, %s437
      %s454 = sphi 0, %s438
    $region4: #{residual_ffn_forward.1} parent=1 // loop_header_branch
      %25 = sbr.rel (%p23) target = $region8
    $region5: #{residual_ffn_forward.1} parent=1 // loop_body
      %s27 = ssub.s32 %s22, 1
      %s28 = ssub.s32 %s22, 2
      %s35 = sadd.s32 1, %s30
      %p36 = scmp.ge.s32.totalorder %s35, 2
      %s37 = scalar_select %p36, 0, %s35
      %s38 = sadd.s32 1, %s29
      %s39 = scalar_select %p36, %s38, %s29
      %p40 = scmp.ge.s32.totalorder %s39, 1
      %s41 = scalar_select %p40, 0, %s39
      %s42 = ssub.s32 %s29, %s41
      %p43 = scmp.eq.s32.totalorder %s42, 0
      %s45 = sadd.s32 %s44, 1
      %s46 = scalar_select %p43, %s44, %s45
      %p49 = pneg %p43
      %p50 = scmp.eq.s32.totalorder %s22, 1
      %p51 = por %p49, %p50
      %p52 = scmp.ne.s32.totalorder %s44, %s47
      %p53 = scmp.eq.s32.totalorder %s22, 0
      %p54 = por %p52, %p53
      %p55 = scmp.ne.s32.totalorder %s44, %s47
      %p56 = scmp.eq.s32.totalorder %s27, 1
      %p57 = por %p55, %p56
      %p58 = scmp.ne.s32.totalorder %s47, %s48
      %p59 = scmp.eq.s32.totalorder %s27, 0
      %p60 = por %p58, %p59
      %p61 = scmp.ne.s32.totalorder %s47, %s48
      %p62 = scmp.eq.s32.totalorder %s28, 1
      %p63 = por %p61, %p62
      %p65 = scmp.ne.s32.totalorder %s48, %s64
      %p66 = scmp.eq.s32.totalorder %s28, 0
      %p67 = por %p65, %p66
      %s68 = ssub.s32 %s30, %s37
      %p69 = scmp.eq.s32.totalorder %s68, 0
      %s71 = sadd.s32 %s70, 1
      %s72 = scalar_select %p69, %s70, %s71
      %p75 = pneg %p69
      %p76 = scmp.eq.s32.totalorder %s22, 1
      %p77 = por %p75, %p76
      %p78 = scmp.ne.s32.totalorder %s70, %s73
      %p79 = scmp.eq.s32.totalorder %s22, 0
      %p80 = por %p78, %p79
      %p81 = scmp.ne.s32.totalorder %s70, %s73
      %p82 = scmp.eq.s32.totalorder %s27, 1
      %p83 = por %p81, %p82
      %p84 = scmp.ne.s32.totalorder %s73, %s74
      %p85 = scmp.eq.s32.totalorder %s27, 0
      %p86 = por %p84, %p85
      %p87 = scmp.ne.s32.totalorder %s73, %s74
      %p88 = scmp.eq.s32.totalorder %s28, 1
      %p89 = por %p87, %p88
      %p91 = scmp.ne.s32.totalorder %s74, %s90
      %p92 = scmp.eq.s32.totalorder %s28, 0
      %p93 = por %p91, %p92
      %s94 = ssub.s32 %s30, %s37
      %p95 = scmp.eq.s32.totalorder %s94, 0
      %s97 = sadd.s32 %s96, 1
      %s98 = scalar_select %p95, %s96, %s97
      %p101 = pneg %p95
      %p102 = scmp.eq.s32.totalorder %s22, 1
      %p103 = por %p101, %p102
      %p104 = scmp.ne.s32.totalorder %s96, %s99
      %p105 = scmp.eq.s32.totalorder %s22, 0
      %p106 = por %p104, %p105
      %p107 = scmp.ne.s32.totalorder %s96, %s99
      %p108 = scmp.eq.s32.totalorder %s27, 1
      %p109 = por %p107, %p108
      %p110 = scmp.ne.s32.totalorder %s99, %s100
      %p111 = scmp.eq.s32.totalorder %s27, 0
      %p112 = por %p110, %p111
      %p113 = scmp.ne.s32.totalorder %s99, %s100
      %p114 = scmp.eq.s32.totalorder %s28, 1
      %p115 = por %p113, %p114
      %p117 = scmp.ne.s32.totalorder %s100, %s116
      %p118 = scmp.eq.s32.totalorder %s28, 0
      %p119 = por %p117, %p118
      %s120 = ssub.s32 %s30, %s37
      %p121 = scmp.eq.s32.totalorder %s120, 0
      %s123 = sadd.s32 %s122, 1
      %s124 = scalar_select %p121, %s122, %s123
      %p127 = pneg %p121
      %p128 = scmp.eq.s32.totalorder %s22, 1
      %p129 = por %p127, %p128
      %p130 = scmp.ne.s32.totalorder %s122, %s125
      %p131 = scmp.eq.s32.totalorder %s22, 0
      %p132 = por %p130, %p131
      %p133 = scmp.ne.s32.totalorder %s122, %s125
      %p134 = scmp.eq.s32.totalorder %s27, 1
      %p135 = por %p133, %p134
      %p136 = scmp.ne.s32.totalorder %s125, %s126
      %p137 = scmp.eq.s32.totalorder %s27, 0
      %p138 = por %p136, %p137
      %p139 = scmp.ne.s32.totalorder %s125, %s126
      %p140 = scmp.eq.s32.totalorder %s28, 1
      %p141 = por %p139, %p140
      %p143 = scmp.ne.s32.totalorder %s126, %s142
      %p144 = scmp.eq.s32.totalorder %s28, 0
      %p145 = por %p143, %p144
      %s146 = ssub.s32 %s30, %s37
      %p147 = scmp.eq.s32.totalorder %s146, 0
      %s149 = sadd.s32 %s148, 1
      %s150 = scalar_select %p147, %s148, %s149
      %p153 = pneg %p147
      %p154 = scmp.eq.s32.totalorder %s22, 1
      %p155 = por %p153, %p154
      %p156 = scmp.ne.s32.totalorder %s148, %s151
      %p157 = scmp.eq.s32.totalorder %s22, 0
      %p158 = por %p156, %p157
      %p159 = scmp.ne.s32.totalorder %s148, %s151
      %p160 = scmp.eq.s32.totalorder %s27, 1
      %p161 = por %p159, %p160
      %p162 = scmp.ne.s32.totalorder %s151, %s152
      %p163 = scmp.eq.s32.totalorder %s27, 0
      %p164 = por %p162, %p163
      %p165 = scmp.ne.s32.totalorder %s151, %s152
      %p166 = scmp.eq.s32.totalorder %s28, 1
      %p167 = por %p165, %p166
      %p169 = scmp.ne.s32.totalorder %s152, %s168
      %p170 = scmp.eq.s32.totalorder %s28, 0
      %p171 = por %p169, %p170
      %s172 = ssub.s32 %s30, %s37
      %p173 = scmp.eq.s32.totalorder %s172, 0
      %s175 = sadd.s32 %s174, 1
      %s176 = scalar_select %p173, %s174, %s175
      %p179 = pneg %p173
      %p180 = scmp.eq.s32.totalorder %s22, 1
      %p181 = por %p179, %p180
      %p182 = scmp.ne.s32.totalorder %s174, %s177
      %p183 = scmp.eq.s32.totalorder %s22, 0
      %p184 = por %p182, %p183
      %p185 = scmp.ne.s32.totalorder %s174, %s177
      %p186 = scmp.eq.s32.totalorder %s27, 1
      %p187 = por %p185, %p186
      %p188 = scmp.ne.s32.totalorder %s177, %s178
      %p189 = scmp.eq.s32.totalorder %s27, 0
      %p190 = por %p188, %p189
      %p191 = scmp.ne.s32.totalorder %s177, %s178
      %p192 = scmp.eq.s32.totalorder %s28, 1
      %p193 = por %p191, %p192
      %p195 = scmp.ne.s32.totalorder %s178, %s194
      %p196 = scmp.eq.s32.totalorder %s28, 0
      %p197 = por %p195, %p196
      %s198 = ssub.s32 %s30, %s37
      %p199 = scmp.eq.s32.totalorder %s198, 0
      %s201 = sadd.s32 %s200, 1
      %s202 = scalar_select %p199, %s200, %s201
      %p205 = pneg %p199
      %p206 = scmp.eq.s32.totalorder %s22, 1
      %p207 = por %p205, %p206
      %p208 = scmp.ne.s32.totalorder %s200, %s203
      %p209 = scmp.eq.s32.totalorder %s22, 0
      %p210 = por %p208, %p209
      %p211 = scmp.ne.s32.totalorder %s200, %s203
      %p212 = scmp.eq.s32.totalorder %s27, 1
      %p213 = por %p211, %p212
      %p214 = scmp.ne.s32.totalorder %s203, %s204
      %p215 = scmp.eq.s32.totalorder %s27, 0
      %p216 = por %p214, %p215
      %p217 = scmp.ne.s32.totalorder %s203, %s204
      %p218 = scmp.eq.s32.totalorder %s28, 1
      %p219 = por %p217, %p218
      %p221 = scmp.ne.s32.totalorder %s204, %s220
      %p222 = scmp.eq.s32.totalorder %s28, 0
      %p223 = por %p221, %p222
      %s224 = ssub.s32 %s30, %s37
      %p225 = scmp.eq.s32.totalorder %s224, 0
      %s227 = sadd.s32 %s226, 1
      %s228 = scalar_select %p225, %s226, %s227
      %p231 = pneg %p225
      %p232 = scmp.eq.s32.totalorder %s22, 1
      %p233 = por %p231, %p232
      %p234 = scmp.ne.s32.totalorder %s226, %s229
      %p235 = scmp.eq.s32.totalorder %s22, 0
      %p236 = por %p234, %p235
      %p237 = scmp.ne.s32.totalorder %s226, %s229
      %p238 = scmp.eq.s32.totalorder %s27, 1
      %p239 = por %p237, %p238
      %p240 = scmp.ne.s32.totalorder %s229, %s230
      %p241 = scmp.eq.s32.totalorder %s27, 0
      %p242 = por %p240, %p241
      %p243 = scmp.ne.s32.totalorder %s229, %s230
      %p244 = scmp.eq.s32.totalorder %s28, 1
      %p245 = por %p243, %p244
      %p247 = scmp.ne.s32.totalorder %s230, %s246
      %p248 = scmp.eq.s32.totalorder %s28, 0
      %p249 = por %p247, %p248
      %s250 = ssub.s32 %s30, %s37
      %p251 = scmp.eq.s32.totalorder %s250, 0
      %s253 = sadd.s32 %s252, 1
      %s254 = scalar_select %p251, %s252, %s253
      %p257 = pneg %p251
      %p258 = scmp.eq.s32.totalorder %s22, 1
      %p259 = por %p257, %p258
      %p260 = scmp.ne.s32.totalorder %s252, %s255
      %p261 = scmp.eq.s32.totalorder %s22, 0
      %p262 = por %p260, %p261
      %p263 = scmp.ne.s32.totalorder %s252, %s255
      %p264 = scmp.eq.s32.totalorder %s27, 1
      %p265 = por %p263, %p264
      %p266 = scmp.ne.s32.totalorder %s255, %s256
      %p267 = scmp.eq.s32.totalorder %s27, 0
      %p268 = por %p266, %p267
      %p269 = scmp.ne.s32.totalorder %s255, %s256
      %p270 = scmp.eq.s32.totalorder %s28, 1
      %p271 = por %p269, %p270
      %p273 = scmp.ne.s32.totalorder %s256, %s272
      %p274 = scmp.eq.s32.totalorder %s28, 0
      %p275 = por %p273, %p274
      %s276 = ssub.s32 %s30, %s37
      %p277 = scmp.eq.s32.totalorder %s276, 0
      %s279 = sadd.s32 %s278, 1
      %s280 = scalar_select %p277, %s278, %s279
      %p283 = pneg %p277
      %p284 = scmp.eq.s32.totalorder %s22, 1
      %p285 = por %p283, %p284
      %p286 = scmp.ne.s32.totalorder %s278, %s281
      %p287 = scmp.eq.s32.totalorder %s22, 0
      %p288 = por %p286, %p287
      %p289 = scmp.ne.s32.totalorder %s278, %s281
      %p290 = scmp.eq.s32.totalorder %s27, 1
      %p291 = por %p289, %p290
      %p292 = scmp.ne.s32.totalorder %s281, %s282
      %p293 = scmp.eq.s32.totalorder %s27, 0
      %p294 = por %p292, %p293
      %p295 = scmp.ne.s32.totalorder %s281, %s282
      %p296 = scmp.eq.s32.totalorder %s28, 1
      %p297 = por %p295, %p296
      %p299 = scmp.ne.s32.totalorder %s282, %s298
      %p300 = scmp.eq.s32.totalorder %s28, 0
      %p301 = por %p299, %p300
      %s302 = ssub.s32 %s30, %s37
      %p303 = scmp.eq.s32.totalorder %s302, 0
      %s305 = sadd.s32 %s304, 1
      %s306 = scalar_select %p303, %s304, %s305
      %p309 = pneg %p303
      %p310 = scmp.eq.s32.totalorder %s22, 1
      %p311 = por %p309, %p310
      %p312 = scmp.ne.s32.totalorder %s304, %s307
      %p313 = scmp.eq.s32.totalorder %s22, 0
      %p314 = por %p312, %p313
      %p315 = scmp.ne.s32.totalorder %s304, %s307
      %p316 = scmp.eq.s32.totalorder %s27, 1
      %p317 = por %p315, %p316
      %p318 = scmp.ne.s32.totalorder %s307, %s308
      %p319 = scmp.eq.s32.totalorder %s27, 0
      %p320 = por %p318, %p319
      %p321 = scmp.ne.s32.totalorder %s307, %s308
      %p322 = scmp.eq.s32.totalorder %s28, 1
      %p323 = por %p321, %p322
      %p325 = scmp.ne.s32.totalorder %s308, %s324
      %p326 = scmp.eq.s32.totalorder %s28, 0
      %p327 = por %p325, %p326
      %s328 = ssub.s32 %s30, %s37
      %p329 = scmp.eq.s32.totalorder %s328, 0
      %s331 = sadd.s32 %s330, 1
      %s332 = scalar_select %p329, %s330, %s331
      %p335 = pneg %p329
      %p336 = scmp.eq.s32.totalorder %s22, 1
      %p337 = por %p335, %p336
      %p338 = scmp.ne.s32.totalorder %s330, %s333
      %p339 = scmp.eq.s32.totalorder %s22, 0
      %p340 = por %p338, %p339
      %p341 = scmp.ne.s32.totalorder %s330, %s333
      %p342 = scmp.eq.s32.totalorder %s27, 1
      %p343 = por %p341, %p342
      %p344 = scmp.ne.s32.totalorder %s333, %s334
      %p345 = scmp.eq.s32.totalorder %s27, 0
      %p346 = por %p344, %p345
      %p347 = scmp.ne.s32.totalorder %s333, %s334
      %p348 = scmp.eq.s32.totalorder %s28, 1
      %p349 = por %p347, %p348
      %p351 = scmp.ne.s32.totalorder %s334, %s350
      %p352 = scmp.eq.s32.totalorder %s28, 0
      %p353 = por %p351, %p352
      %s354 = ssub.s32 %s30, %s37
      %p355 = scmp.eq.s32.totalorder %s354, 0
      %s357 = sadd.s32 %s356, 1
      %s358 = scalar_select %p355, %s356, %s357
      %p361 = pneg %p355
      %p362 = scmp.eq.s32.totalorder %s22, 1
      %p363 = por %p361, %p362
      %p364 = scmp.ne.s32.totalorder %s356, %s359
      %p365 = scmp.eq.s32.totalorder %s22, 0
      %p366 = por %p364, %p365
      %p367 = scmp.ne.s32.totalorder %s356, %s359
      %p368 = scmp.eq.s32.totalorder %s27, 1
      %p369 = por %p367, %p368
      %p370 = scmp.ne.s32.totalorder %s359, %s360
      %p371 = scmp.eq.s32.totalorder %s27, 0
      %p372 = por %p370, %p371
      %p373 = scmp.ne.s32.totalorder %s359, %s360
      %p374 = scmp.eq.s32.totalorder %s28, 1
      %p375 = por %p373, %p374
      %p377 = scmp.ne.s32.totalorder %s360, %s376
      %p378 = scmp.eq.s32.totalorder %s28, 0
      %p379 = por %p377, %p378
      %s380 = ssub.s32 %s30, %s37
      %p381 = scmp.eq.s32.totalorder %s380, 0
      %s383 = sadd.s32 %s382, 1
      %s384 = scalar_select %p381, %s382, %s383
      %p387 = pneg %p381
      %p388 = scmp.eq.s32.totalorder %s22, 1
      %p389 = por %p387, %p388
      %p390 = scmp.ne.s32.totalorder %s382, %s385
      %p391 = scmp.eq.s32.totalorder %s22, 0
      %p392 = por %p390, %p391
      %p393 = scmp.ne.s32.totalorder %s382, %s385
      %p394 = scmp.eq.s32.totalorder %s27, 1
      %p395 = por %p393, %p394
      %p396 = scmp.ne.s32.totalorder %s385, %s386
      %p397 = scmp.eq.s32.totalorder %s27, 0
      %p398 = por %p396, %p397
      %p399 = scmp.ne.s32.totalorder %s385, %s386
      %p400 = scmp.eq.s32.totalorder %s28, 1
      %p401 = por %p399, %p400
      %p403 = scmp.ne.s32.totalorder %s386, %s402
      %p404 = scmp.eq.s32.totalorder %s28, 0
      %p405 = por %p403, %p404
      %s406 = ssub.s32 %s30, %s37
      %p407 = scmp.eq.s32.totalorder %s406, 0
      %s409 = sadd.s32 %s408, 1
      %s410 = scalar_select %p407, %s408, %s409
      %p413 = pneg %p407
      %p414 = scmp.eq.s32.totalorder %s22, 1
      %p415 = por %p413, %p414
      %p416 = scmp.ne.s32.totalorder %s408, %s411
      %p417 = scmp.eq.s32.totalorder %s22, 0
      %p418 = por %p416, %p417
      %p419 = scmp.ne.s32.totalorder %s408, %s411
      %p420 = scmp.eq.s32.totalorder %s27, 1
      %p421 = por %p419, %p420
      %p422 = scmp.ne.s32.totalorder %s411, %s412
      %p423 = scmp.eq.s32.totalorder %s27, 0
      %p424 = por %p422, %p423
      %p425 = scmp.ne.s32.totalorder %s411, %s412
      %p426 = scmp.eq.s32.totalorder %s28, 1
      %p427 = por %p425, %p426
      %p429 = scmp.ne.s32.totalorder %s412, %s428
      %p430 = scmp.eq.s32.totalorder %s28, 0
      %p431 = por %p429, %p430
      %s432 = ssub.s32 %s29, %s41
      %p433 = scmp.eq.s32.totalorder %s432, 0
      %s435 = sadd.s32 %s434, 1
      %s436 = scalar_select %p433, %s434, %s435
      %p439 = pneg %p433
      %p440 = scmp.eq.s32.totalorder %s22, 1
      %p441 = por %p439, %p440
      %p442 = scmp.ne.s32.totalorder %s434, %s437
      %p443 = scmp.eq.s32.totalorder %s22, 0
      %p444 = por %p442, %p443
      %p445 = scmp.ne.s32.totalorder %s434, %s437
      %p446 = scmp.eq.s32.totalorder %s27, 1
      %p447 = por %p445, %p446
      %p448 = scmp.ne.s32.totalorder %s437, %s438
      %p449 = scmp.eq.s32.totalorder %s27, 0
      %p450 = por %p448, %p449
      %p451 = scmp.ne.s32.totalorder %s437, %s438
      %p452 = scmp.eq.s32.totalorder %s28, 1
      %p453 = por %p451, %p452
      %p455 = scmp.ne.s32.totalorder %s438, %s454
      %p456 = scmp.eq.s32.totalorder %s28, 0
      %p457 = por %p455, %p456
      %p458 = scmp.le.s32.totalorder 1, %s22
      %p459 = scmp.lt.s32.totalorder %s22, 3
      %p460 = pnand %p458, %p459
      %p461 = pneg %p460
      // Predicated region
      $region9: #{residual_ffn_forward.1} parent=5 // pred_check
        _
      $region10: #{residual_ffn_forward.1} parent=5 // pred_check_branch
        %463 = sbr.rel (%p460) target = $region12
      $region11: #{residual_ffn_forward.1} parent=5 // pred_region
        %s464 = ssub.s32 %s22, 1
        // Predicated region
        $region13: #{residual_ffn_forward.1} parent=11 // pred_check
          %p465 = pneg %p60
        $region14: #{residual_ffn_forward.1} parent=11 // pred_check_branch
          %467 = sbr.rel (%p465) target = $region16
        $region15: #{residual_ffn_forward.1} parent=11 // pred_region
          %s468 = smul.u32 2, %s31
          %p469 = scmp.lt.s32.totalorder %s468, 1
          %s470 = scalar_select %p469, %s468, 1
          %s471 = smul.addr %s470, 8
          %s472 = scalar_lea.vmem %s0, %s471
          %s473 = smul.u32 2, %s31
        $region16: #{residual_ffn_forward.1} parent=11 // pred_fallthru
          _
      $region12: #{residual_ffn_forward.1} parent=5 // pred_fallthru
        _
      %p474 = scmp.lt.s32.totalorder %s22, 2
      // Predicated region
      $region17: #{residual_ffn_forward.1} parent=5 // pred_check
        %p475 = pneg %p474
      $region18: #{residual_ffn_forward.1} parent=5 // pred_check_branch
        %477 = sbr.rel (%p475) target = $region20
      $region19: #{residual_ffn_forward.1} parent=5 // pred_region
        // Predicated region
        $region21: #{residual_ffn_forward.1} parent=19 // pred_check
          %p478 = pneg %p80
        $region22: #{residual_ffn_forward.1} parent=19 // pred_check_branch
          %480 = sbr.rel (%p478) target = $region24
        $region23: #{residual_ffn_forward.1} parent=19 // pred_region
          %p481 = scmp.lt.s32.totalorder %s30, 1
          %s482 = scalar_select %p481, %s30, 1
          %s483 = smul.addr %s482, 4
          %s484 = smul.addr %s483, 4
          %s485 = scalar_lea.vmem %s1, %s484
        $region24: #{residual_ffn_forward.1} parent=19 // pred_fallthru
          _
        // Predicated region
        $region25: #{residual_ffn_forward.1} parent=19 // pred_check
          %p486 = pneg %p106
        $region26: #{residual_ffn_forward.1} parent=19 // pred_check_branch
          %488 = sbr.rel (%p486) target = $region28
        $region27: #{residual_ffn_forward.1} parent=19 // pred_region
          %p489 = scmp.lt.s32.totalorder %s30, 1
          %s490 = scalar_select %p489, %s30, 1
          %s491 = smul.addr %s490, 4
          %s492 = scalar_lea.vmem %s2, %s491
        $region28: #{residual_ffn_forward.1} parent=19 // pred_fallthru
          _
        // Predicated region
        $region29: #{residual_ffn_forward.1} parent=19 // pred_check
          %p493 = pneg %p132
        $region30: #{residual_ffn_forward.1} parent=19 // pred_check_branch
          %495 = sbr.rel (%p493) target = $region32
        $region31: #{residual_ffn_forward.1} parent=19 // pred_region
          %p496 = scmp.lt.s32.totalorder %s30, 1
          %s497 = scalar_select %p496, %s30, 1
          %s498 = smul.addr %s497, 16
          %s499 = smul.addr %s498, 4
          %s500 = scalar_lea.vmem %s3, %s499
        $region32: #{residual_ffn_forward.1} parent=19 // pred_fallthru
          _
        // Predicated region
        $region33: #{residual_ffn_forward.1} parent=19 // pred_check
          %p501 = pneg %p158
        $region34: #{residual_ffn_forward.1} parent=19 // pred_check_branch
          %503 = sbr.rel (%p501) target = $region36
        $region35: #{residual_ffn_forward.1} parent=19 // pred_region
          %p504 = scmp.lt.s32.totalorder %s30, 1
          %s505 = scalar_select %p504, %s30, 1
          %s506 = smul.addr %s505, 4
          %s507 = scalar_lea.vmem %s4, %s506
        $region36: #{residual_ffn_forward.1} parent=19 // pred_fallthru
          _
        // Predicated region
        $region37: #{residual_ffn_forward.1} parent=19 // pred_check
          %p508 = pneg %p184
        $region38: #{residual_ffn_forward.1} parent=19 // pred_check_branch
          %510 = sbr.rel (%p508) target = $region40
        $region39: #{residual_ffn_forward.1} parent=19 // pred_region
          %p511 = scmp.lt.s32.totalorder %s30, 1
          %s512 = scalar_select %p511, %s30, 1
          %s513 = smul.addr %s512, 8
          %s514 = smul.addr %s513, 4
          %s515 = scalar_lea.vmem %s5, %s514
        $region40: #{residual_ffn_forward.1} parent=19 // pred_fallthru
          _
        // Predicated region
        $region41: #{residual_ffn_forward.1} parent=19 // pred_check
          %p516 = pneg %p210
        $region42: #{residual_ffn_forward.1} parent=19 // pred_check_branch
          %518 = sbr.rel (%p516) target = $region44
        $region43: #{residual_ffn_forward.1} parent=19 // pred_region
          %p519 = scmp.lt.s32.totalorder %s30, 1
          %s520 = scalar_select %p519, %s30, 1
          %s521 = smul.addr %s520, 4
          %s522 = scalar_lea.vmem %s6, %s521
        $region44: #{residual_ffn_forward.1} parent=19 // pred_fallthru
          _
        // Predicated region
        $region45: #{residual_ffn_forward.1} parent=19 // pred_check
          %p523 = pneg %p236
        $region46: #{residual_ffn_forward.1} parent=19 // pred_check_branch
          %525 = sbr.rel (%p523) target = $region48
        $region47: #{residual_ffn_forward.1} parent=19 // pred_region
          %p526 = scmp.lt.s32.totalorder %s30, 1
          %s527 = scalar_select %p526, %s30, 1
          %s528 = smul.addr %s527, 8
          %s529 = smul.addr %s528, 4
          %s530 = scalar_lea.vmem %s7, %s529
        $region48: #{residual_ffn_forward.1} parent=19 // pred_fallthru
          _
        // Predicated region
        $region49: #{residual_ffn_forward.1} parent=19 // pred_check
          %p531 = pneg %p262
        $region50: #{residual_ffn_forward.1} parent=19 // pred_check_branch
          %533 = sbr.rel (%p531) target = $region52
        $region51: #{residual_ffn_forward.1} parent=19 // pred_region
          %p534 = scmp.lt.s32.totalorder %s30, 1
          %s535 = scalar_select %p534, %s30, 1
          %s536 = smul.addr %s535, 2
          %s537 = smul.addr %s536, 4
          %s538 = scalar_lea.vmem %s8, %s537
        $region52: #{residual_ffn_forward.1} parent=19 // pred_fallthru
          _
        // Predicated region
        $region53: #{residual_ffn_forward.1} parent=19 // pred_check
          %p539 = pneg %p288
        $region54: #{residual_ffn_forward.1} parent=19 // pred_check_branch
          %541 = sbr.rel (%p539) target = $region56
        $region55: #{residual_ffn_forward.1} parent=19 // pred_region
          %p542 = scmp.lt.s32.totalorder %s30, 1
          %s543 = scalar_select %p542, %s30, 1
          %s544 = smul.addr %s543, 32
          %s545 = smul.addr %s544, 4
          %s546 = scalar_lea.vmem %s9, %s545
        $region56: #{residual_ffn_forward.1} parent=19 // pred_fallthru
          _
        // Predicated region
        $region57: #{residual_ffn_forward.1} parent=19 // pred_check
          %p547 = pneg %p314
        $region58: #{residual_ffn_forward.1} parent=19 // pred_check_branch
          %549 = sbr.rel (%p547) target = $region60
        $region59: #{residual_ffn_forward.1} parent=19 // pred_region
          %p550 = scmp.lt.s32.totalorder %s30, 1
          %s551 = scalar_select %p550, %s30, 1
          %s552 = smul.addr %s551, 4
          %s553 = scalar_lea.vmem %s10, %s552
        $region60: #{residual_ffn_forward.1} parent=19 // pred_fallthru
          _
        // Predicated region
        $region61: #{residual_ffn_forward.1} parent=19 // pred_check
          %p554 = pneg %p340
        $region62: #{residual_ffn_forward.1} parent=19 // pred_check_branch
          %556 = sbr.rel (%p554) target = $region64
        $region63: #{residual_ffn_forward.1} parent=19 // pred_region
          %p557 = scmp.lt.s32.totalorder %s30, 1
          %s558 = scalar_select %p557, %s30, 1
          %s559 = smul.addr %s558, 16
          %s560 = smul.addr %s559, 4
          %s561 = scalar_lea.vmem %s11, %s560
        $region64: #{residual_ffn_forward.1} parent=19 // pred_fallthru
          _
        // Predicated region
        $region65: #{residual_ffn_forward.1} parent=19 // pred_check
          %p562 = pneg %p366
        $region66: #{residual_ffn_forward.1} parent=19 // pred_check_branch
          %564 = sbr.rel (%p562) target = $region68
        $region67: #{residual_ffn_forward.1} parent=19 // pred_region
          %p565 = scmp.lt.s32.totalorder %s30, 1
          %s566 = scalar_select %p565, %s30, 1
          %s567 = smul.addr %s566, 4
          %s568 = scalar_lea.vmem %s12, %s567
        $region68: #{residual_ffn_forward.1} parent=19 // pred_fallthru
          _
        // Predicated region
        $region69: #{residual_ffn_forward.1} parent=19 // pred_check
          %p569 = pneg %p392
        $region70: #{residual_ffn_forward.1} parent=19 // pred_check_branch
          %571 = sbr.rel (%p569) target = $region72
        $region71: #{residual_ffn_forward.1} parent=19 // pred_region
          %p572 = scmp.lt.s32.totalorder %s30, 1
          %s573 = scalar_select %p572, %s30, 1
          %s574 = smul.addr %s573, 8
          %s575 = smul.addr %s574, 4
          %s576 = scalar_lea.vmem %s13, %s575
        $region72: #{residual_ffn_forward.1} parent=19 // pred_fallthru
          _
        // Predicated region
        $region73: #{residual_ffn_forward.1} parent=19 // pred_check
          %p577 = pneg %p418
        $region74: #{residual_ffn_forward.1} parent=19 // pred_check_branch
          %579 = sbr.rel (%p577) target = $region76
        $region75: #{residual_ffn_forward.1} parent=19 // pred_region
          %p580 = scmp.lt.s32.totalorder %s30, 1
          %s581 = scalar_select %p580, %s30, 1
          %s582 = smul.addr %s581, 4
          %s583 = scalar_lea.vmem %s14, %s582
        $region76: #{residual_ffn_forward.1} parent=19 // pred_fallthru
          _
      $region20: #{residual_ffn_forward.1} parent=5 // pred_fallthru
        _
      %p584 = scmp.le.s32.totalorder 1, %s22
      %p585 = scmp.lt.s32.totalorder %s22, 3
      %p586 = pnand %p584, %p585
      %p587 = pneg %p586
      // Predicated region
      $region77: #{residual_ffn_forward.1} parent=5 // pred_check
        _
      $region78: #{residual_ffn_forward.1} parent=5 // pred_check_branch
        %589 = sbr.rel (%p586) target = $region80
      $region79: #{residual_ffn_forward.1} parent=5 // pred_region
        %s590 = ssub.s32 %s22, 1
        %s591 = smul.u32 2, %s31
        %p592 = scmp.lt.s32.totalorder %s591, 1
        %s593 = scalar_select %p592, %s591, 1
        %s594 = smul.addr %s593, 8
        %s595 = scalar_lea.vmem %s0, %s594
        %p596 = pneg %p60
        %p597 = pneg %p57
        %p598 = scmp.lt.s32.totalorder %s32, 1
        %s599 = scalar_select %p598, %s32, 1
        %s600 = smul.addr %s599, 4
        %s601 = smul.addr %s600, 4
        %s602 = scalar_lea.vmem %s1, %s601
        %p603 = pneg %p86
        %p604 = pneg %p83
        %p605 = scmp.lt.s32.totalorder %s32, 1
        %s606 = scalar_select %p605, %s32, 1
        %s607 = smul.addr %s606, 4
        %s608 = scalar_lea.vmem %s2, %s607
        %p609 = pneg %p112
        %p610 = pneg %p109
        %p611 = scmp.lt.s32.totalorder %s32, 1
        %s612 = scalar_select %p611, %s32, 1
        %s613 = smul.addr %s612, 16
        %s614 = smul.addr %s613, 4
        %s615 = scalar_lea.vmem %s3, %s614
        %p616 = pneg %p138
        %p617 = pneg %p135
        %p618 = scmp.lt.s32.totalorder %s32, 1
        %s619 = scalar_select %p618, %s32, 1
        %s620 = smul.addr %s619, 4
        %s621 = scalar_lea.vmem %s4, %s620
        %p622 = pneg %p164
        %p623 = pneg %p161
        %p624 = scmp.lt.s32.totalorder %s32, 1
        %s625 = scalar_select %p624, %s32, 1
        %s626 = smul.addr %s625, 8
        %s627 = smul.addr %s626, 4
        %s628 = scalar_lea.vmem %s5, %s627
        %p629 = pneg %p190
        %p630 = pneg %p187
        %p631 = scmp.lt.s32.totalorder %s32, 1
        %s632 = scalar_select %p631, %s32, 1
        %s633 = smul.addr %s632, 4
        %s634 = scalar_lea.vmem %s6, %s633
        %p635 = pneg %p216
        %p636 = pneg %p213
        %p637 = scmp.lt.s32.totalorder %s32, 1
        %s638 = scalar_select %p637, %s32, 1
        %s639 = smul.addr %s638, 8
        %s640 = smul.addr %s639, 4
        %s641 = scalar_lea.vmem %s7, %s640
        %p642 = pneg %p242
        %p643 = pneg %p239
        %p644 = scmp.lt.s32.totalorder %s32, 1
        %s645 = scalar_select %p644, %s32, 1
        %s646 = smul.addr %s645, 2
        %s647 = smul.addr %s646, 4
        %s648 = scalar_lea.vmem %s8, %s647
        %p649 = pneg %p268
        %p650 = pneg %p265
        %p651 = scmp.lt.s32.totalorder %s32, 1
        %s652 = scalar_select %p651, %s32, 1
        %s653 = smul.addr %s652, 32
        %s654 = smul.addr %s653, 4
        %s655 = scalar_lea.vmem %s9, %s654
        %p656 = pneg %p294
        %p657 = pneg %p291
        %p658 = scmp.lt.s32.totalorder %s32, 1
        %s659 = scalar_select %p658, %s32, 1
        %s660 = smul.addr %s659, 4
        %s661 = scalar_lea.vmem %s10, %s660
        %p662 = pneg %p320
        %p663 = pneg %p317
        %p664 = scmp.lt.s32.totalorder %s32, 1
        %s665 = scalar_select %p664, %s32, 1
        %s666 = smul.addr %s665, 16
        %s667 = smul.addr %s666, 4
        %s668 = scalar_lea.vmem %s11, %s667
        %p669 = pneg %p346
        %p670 = pneg %p343
        %p671 = scmp.lt.s32.totalorder %s32, 1
        %s672 = scalar_select %p671, %s32, 1
        %s673 = smul.addr %s672, 4
        %s674 = scalar_lea.vmem %s12, %s673
        %p675 = pneg %p372
        %p676 = pneg %p369
        %p677 = scmp.lt.s32.totalorder %s32, 1
        %s678 = scalar_select %p677, %s32, 1
        %s679 = smul.addr %s678, 8
        %s680 = smul.addr %s679, 4
        %s681 = scalar_lea.vmem %s13, %s680
        %p682 = pneg %p398
        %p683 = pneg %p395
        %p684 = scmp.lt.s32.totalorder %s32, 1
        %s685 = scalar_select %p684, %s32, 1
        %s686 = smul.addr %s685, 4
        %s687 = scalar_lea.vmem %s14, %s686
        %p688 = pneg %p424
        %p689 = pneg %p421
        %p690 = pneg %p450
        %p691 = pneg %p447
        %s692 = smul.u32 2, %s31
        %p693 = scmp.lt.s32.totalorder %s692, 1
        %s694 = scalar_select %p693, %s692, 1
        %s695 = smul.addr %s694, 8
        %s696 = scalar_lea.vmem %s0, %s695
        %s697 = smul.u32 2, %s31
        %p698 = scmp.lt.s32.totalorder %s32, 1
        %s699 = scalar_select %p698, %s32, 1
        %s700 = smul.addr %s699, 4
        %s701 = smul.addr %s700, 4
        %s702 = scalar_lea.vmem %s1, %s701
        %p703 = scmp.lt.s32.totalorder %s32, 1
        %s704 = scalar_select %p703, %s32, 1
        %s705 = smul.addr %s704, 4
        %s706 = scalar_lea.vmem %s2, %s705
        %p707 = scmp.lt.s32.totalorder %s32, 1
        %s708 = scalar_select %p707, %s32, 1
        %s709 = smul.addr %s708, 16
        %s710 = smul.addr %s709, 4
        %s711 = scalar_lea.vmem %s3, %s710
        %p712 = scmp.lt.s32.totalorder %s32, 1
        %s713 = scalar_select %p712, %s32, 1
        %s714 = smul.addr %s713, 4
        %s715 = scalar_lea.vmem %s4, %s714
        %p716 = scmp.lt.s32.totalorder %s32, 1
        %s717 = scalar_select %p716, %s32, 1
        %s718 = smul.addr %s717, 8
        %s719 = smul.addr %s718, 4
        %s720 = scalar_lea.vmem %s5, %s719
        %p721 = scmp.lt.s32.totalorder %s32, 1
        %s722 = scalar_select %p721, %s32, 1
        %s723 = smul.addr %s722, 4
        %s724 = scalar_lea.vmem %s6, %s723
        %p725 = scmp.lt.s32.totalorder %s32, 1
        %s726 = scalar_select %p725, %s32, 1
        %s727 = smul.addr %s726, 8
        %s728 = smul.addr %s727, 4
        %s729 = scalar_lea.vmem %s7, %s728
        %p730 = scmp.lt.s32.totalorder %s32, 1
        %s731 = scalar_select %p730, %s32, 1
        %s732 = smul.addr %s731, 2
        %s733 = smul.addr %s732, 4
        %s734 = scalar_lea.vmem %s8, %s733
        %p735 = scmp.lt.s32.totalorder %s32, 1
        %s736 = scalar_select %p735, %s32, 1
        %s737 = smul.addr %s736, 32
        %s738 = smul.addr %s737, 4
        %s739 = scalar_lea.vmem %s9, %s738
        %p740 = scmp.lt.s32.totalorder %s32, 1
        %s741 = scalar_select %p740, %s32, 1
        %s742 = smul.addr %s741, 4
        %s743 = scalar_lea.vmem %s10, %s742
        %p744 = scmp.lt.s32.totalorder %s32, 1
        %s745 = scalar_select %p744, %s32, 1
        %s746 = smul.addr %s745, 16
        %s747 = smul.addr %s746, 4
        %s748 = scalar_lea.vmem %s11, %s747
        %p749 = scmp.lt.s32.totalorder %s32, 1
        %s750 = scalar_select %p749, %s32, 1
        %s751 = smul.addr %s750, 4
        %s752 = scalar_lea.vmem %s12, %s751
        %p753 = scmp.lt.s32.totalorder %s32, 1
        %s754 = scalar_select %p753, %s32, 1
        %s755 = smul.addr %s754, 8
        %s756 = smul.addr %s755, 4
        %s757 = scalar_lea.vmem %s13, %s756
        %p758 = scmp.lt.s32.totalorder %s32, 1
        %s759 = scalar_select %p758, %s32, 1
        %s760 = smul.addr %s759, 4
        %s761 = scalar_lea.vmem %s14, %s760
        %s762 = smul.u32 2, %s31
        %p764 = scmp.eq.s32.totalorder %s32, 0
        // Predicated region
        $region81: #{residual_ffn_forward.1} parent=79 // pred_check
          %p765 = pneg %p764
        $region82: #{residual_ffn_forward.1} parent=79 // pred_check_branch
          %767 = sbr.rel (%p765) target = $region84
        $region83: #{residual_ffn_forward.1} parent=79 // pred_region
          %v768 = vld [vmem:[%s696] sm:$0xff]
          %v769 = vld [vmem:[%s696 + $0x8] sm:$0xff]
          %v770 = vpack.c.bf16 %v768, %v768
          %v771 = vpack.c.bf16 %v769, %v769
          %vm772 = vcmask 257024
          %773 = vst.msk [vmem:[#allocation2] sm:$0xf] %vm772, %v770
          %774 = vst.msk [vmem:[#allocation2 + $0x4] sm:$0xf] %vm772, %v771
        $region84: #{residual_ffn_forward.1} parent=79 // pred_fallthru
          _
        %v775 = vld [vmem:[#allocation2] sm:$0xf]
        %v776 = vld [vmem:[#allocation2 + $0x4] sm:$0xf]
        %v777 = vld [vmem:[%s706] sm:$0x7]
        %v778 = vld [vmem:[%s702] sm:$0xf]
        %v779 = vld [vmem:[%s702 + $0x4] sm:$0xf]
        %v780 = vld [vmem:[%s702 + $0x8] sm:$0xf]
        %v781 = vld [vmem:[%s702 + $0xc] sm:$0xf]
        %v782 = vperm.slane %v777, 0
        %v785 = vunpack.c.l.b16 %v775
        %v786 = vunpack.c.l.b16 %v776
        %v787 = vpack.c.b16 %v786, %v785
        %v792 = vunpack.c.l.b16 %v778
        %v793 = vunpack.c.l.b16 %v779
        %v794 = vunpack.c.l.b16 %v780
        %v795 = vunpack.c.l.b16 %v781
        %v796 = vpack.c.b16 %v793, %v792
        %v797 = vpack.c.b16 %v795, %v794
        %vm800 = vcmask 261120
        %v802 = vsel %vm800, %v787, 0
        %804 = vmatpush.bf16.msra.mxu0 0
        %805 = vmatpush.bf16.msra.mxu0 0
        %806 = vmatpush.bf16.msra.mxu0 0
        %807 = vmatpush.bf16.msra.mxu0 0
        %808 = vmatpush.bf16.msra.mxu0 0
        %809 = vmatpush.bf16.msra.mxu0 0
        %810 = vmatpush.bf16.msra.mxu0 %v797
        %811 = vmatpush.bf16.msra.mxu0 %v796
        %812 = vmatmul.bf16.gmra.mxu0 %v802
        %v813 = vpop.f32.mrf.mxu0
        %v814 = vadd.f32 %v782, %v813
        %v815 = vpop.f32.mrf.mxu0
        %v816 = vadd.f32 %v782, %v815
        %817 = vdwg.mxu0
        %v818 = vmax.f32 %v814, 0.0
        %v819 = vmax.f32 %v816, 0.0
        %820 = vadd.xlane.f32.xlu0 %v818
        %v821 = vpop.xlane.xlu0 %820
        %822 = vadd.xlane.f32.xlu0 %v819
        %v823 = vpop.xlane.xlu0 %822
        %v824 = vrcp.pop 128.0
        %v825 = vmul.f32 128.0, %v824
        %v826 = vsub.f32 1.0, %v825
        %v827 = vmul.f32 %v824, %v826
        %v828 = vadd.f32 %v824, %v827
        %vm829 = vweird.f32 %v824
        %v830 = vsel %vm829, %v824, %v828
        %v831 = vmul.f32 %v821, %v830
        %v832 = vmul.f32 %v823, %v830
        %v833 = vsub.f32 %v818, %v831
        %v834 = vsub.f32 %v819, %v832
        %v835 = vmul.f32 %v833, %v833
        %v836 = vmul.f32 %v834, %v834
        %837 = vadd.xlane.f32.xlu0 %v835
        %v838 = vpop.xlane.xlu0 %837
        %839 = vadd.xlane.f32.xlu0 %v836
        %v840 = vpop.xlane.xlu0 %839
        %v841 = vmul.f32 %v838, %v830
        %v842 = vmul.f32 %v840, %v830
        %v843 = vadd.f32 %v841, 1e-05
        %v844 = vadd.f32 %v842, 1e-05
        %v845 = vrsqrt.pop %v843
        %v846 = vmul.f32 %v845, %v843
        %v847 = vmul.f32 %v846, %v845
        %v848 = vmul.f32 0.5, %v847
        %v849 = vsub.f32 1.5, %v848
        %v850 = vmul.f32 %v845, %v849
        %vm851 = vweird.f32 %v843
        %vm852 = vweird.f32 %v845
        %vm853 = vmor %vm851, %vm852
        %v854 = vsel %vm853, %v845, %v850
        %v855 = vrsqrt.pop %v844
        %v856 = vmul.f32 %v855, %v844
        %v857 = vmul.f32 %v856, %v855
        %v858 = vmul.f32 0.5, %v857
        %v859 = vsub.f32 1.5, %v858
        %v860 = vmul.f32 %v855, %v859
        %vm861 = vweird.f32 %v844
        %vm862 = vweird.f32 %v855
        %vm863 = vmor %vm861, %vm862
        %v864 = vsel %vm863, %v855, %v860
        %v865 = vmul.f32 %v833, %v854
        %v866 = vmul.f32 %v834, %v864
        %v867 = vperm.slane %v777, 1
        %v868 = vmul.f32 %v865, %v867
        %v869 = vmul.f32 %v866, %v867
        %v870 = vperm.slane %v777, 2
        %v871 = vadd.f32 %v868, %v870
        %v872 = vadd.f32 %v869, %v870
        %v873 = vpack.c.bf16 %v872, %v871
        %v874 = vld [vmem:[%s715] sm:$0x7]
        %v875 = vld [vmem:[%s711] sm:$0xf]
        %v876 = vld [vmem:[%s711 + $0x4] sm:$0xf]
        %v877 = vld [vmem:[%s711 + $0x8] sm:$0xf]
        %v878 = vld [vmem:[%s711 + $0xc] sm:$0xf]
        %v879 = vld [vmem:[%s711 + $0x10] sm:$0xf]
        %v880 = vld [vmem:[%s711 + $0x14] sm:$0xf]
        %v881 = vld [vmem:[%s711 + $0x18] sm:$0xf]
        %v882 = vld [vmem:[%s711 + $0x1c] sm:$0xf]
        %v883 = vld [vmem:[%s711 + $0x20] sm:$0xf]
        %v884 = vld [vmem:[%s711 + $0x24] sm:$0xf]
        %v885 = vld [vmem:[%s711 + $0x28] sm:$0xf]
        %v886 = vld [vmem:[%s711 + $0x2c] sm:$0xf]
        %v887 = vld [vmem:[%s711 + $0x30] sm:$0xf]
        %v888 = vld [vmem:[%s711 + $0x34] sm:$0xf]
        %v889 = vld [vmem:[%s711 + $0x38] sm:$0xf]
        %v890 = vld [vmem:[%s711 + $0x3c] sm:$0xf]
        %v891 = vperm.slane %v874, 0
        %v908 = vunpack.c.l.b16 %v875
        %v909 = vunpack.c.l.b16 %v876
        %v910 = vunpack.c.l.b16 %v877
        %v911 = vunpack.c.l.b16 %v878
        %v912 = vunpack.c.l.b16 %v879
        %v913 = vunpack.c.l.b16 %v880
        %v914 = vunpack.c.l.b16 %v881
        %v915 = vunpack.c.l.b16 %v882
        %v916 = vunpack.c.l.b16 %v883
        %v917 = vunpack.c.l.b16 %v884
        %v918 = vunpack.c.l.b16 %v885
        %v919 = vunpack.c.l.b16 %v886
        %v920 = vunpack.c.l.b16 %v887
        %v921 = vunpack.c.l.b16 %v888
        %v922 = vunpack.c.l.b16 %v889
        %v923 = vunpack.c.l.b16 %v890
        %v924 = vpack.c.b16 %v909, %v908
        %v925 = vpack.c.b16 %v911, %v910
        %v926 = vpack.c.b16 %v913, %v912
        %v927 = vpack.c.b16 %v915, %v914
        %v928 = vpack.c.b16 %v917, %v916
        %v929 = vpack.c.b16 %v919, %v918
        %v930 = vpack.c.b16 %v921, %v920
        %v931 = vpack.c.b16 %v923, %v922
        %940 = vmatpush.bf16.msra.mxu0 %v931
        %941 = vmatpush.bf16.msra.mxu0 %v930
        %942 = vmatpush.bf16.msra.mxu0 %v929
        %943 = vmatpush.bf16.msra.mxu0 %v928
        %944 = vmatpush.bf16.msra.mxu0 %v927
        %945 = vmatpush.bf16.msra.mxu0 %v926
        %946 = vmatpush.bf16.msra.mxu0 %v925
        %947 = vmatpush.bf16.msra.mxu0 %v924
        %948 = vmatmul.bf16.gmra.mxu0 %v873
        %v949 = vpop.f32.mrf.mxu0
        %v950 = vadd.f32 %v891, %v949
        %v951 = vpop.f32.mrf.mxu0
        %v952 = vadd.f32 %v891, %v951
        %953 = vdwg.mxu0
        %v954 = vmax.f32 %v950, 0.0
        %v955 = vmax.f32 %v952, 0.0
        %vm956 = vcmask 523264
        %v957 = vsel %vm956, %v954, 0.0
        %958 = vadd.xlane.f32.xlu0 %v957
        %v959 = vpop.xlane.xlu0 %958
        %v960 = vsel %vm956, %v955, 0.0
        %961 = vadd.xlane.f32.xlu0 %v960
        %v962 = vpop.xlane.xlu0 %961
        %v963 = vrcp.pop 64.0
        %v964 = vmul.f32 64.0, %v963
        %v965 = vsub.f32 1.0, %v964
        %v966 = vmul.f32 %v963, %v965
        %v967 = vadd.f32 %v963, %v966
        %vm968 = vweird.f32 %v963
        %v969 = vsel %vm968, %v963, %v967
        %v970 = vmul.f32 %v959, %v969
        %v971 = vmul.f32 %v962, %v969
        %v972 = vsub.f32 %v954, %v970
        %v973 = vsub.f32 %v955, %v971
        %v974 = vmul.f32 %v972, %v972
        %v975 = vmul.f32 %v973, %v973
        %v976 = vsel %vm956, %v974, 0.0
        %977 = vadd.xlane.f32.xlu0 %v976
        %v978 = vpop.xlane.xlu0 %977
        %v979 = vsel %vm956, %v975, 0.0
        %980 = vadd.xlane.f32.xlu0 %v979
        %v981 = vpop.xlane.xlu0 %980
        %v982 = vmul.f32 %v978, %v969
        %v983 = vmul.f32 %v981, %v969
        %v984 = vadd.f32 %v982, 1e-05
        %v985 = vadd.f32 %v983, 1e-05
        %v986 = vrsqrt.pop %v984
        %v987 = vmul.f32 %v986, %v984
        %v988 = vmul.f32 %v987, %v986
        %v989 = vmul.f32 0.5, %v988
        %v990 = vsub.f32 1.5, %v989
        %v991 = vmul.f32 %v986, %v990
        %vm992 = vweird.f32 %v984
        %vm993 = vweird.f32 %v986
        %vm994 = vmor %vm992, %vm993
        %v995 = vsel %vm994, %v986, %v991
        %v996 = vrsqrt.pop %v985
        %v997 = vmul.f32 %v996, %v985
        %v998 = vmul.f32 %v997, %v996
        %v999 = vmul.f32 0.5, %v998
        %v1000 = vsub.f32 1.5, %v999
        %v1001 = vmul.f32 %v996, %v1000
        %vm1002 = vweird.f32 %v985
        %vm1003 = vweird.f32 %v996
        %vm1004 = vmor %vm1002, %vm1003
        %v1005 = vsel %vm1004, %v996, %v1001
        %v1006 = vmul.f32 %v972, %v995
        %v1007 = vmul.f32 %v973, %v1005
        %v1008 = vperm.slane %v874, 1
        %v1009 = vmul.f32 %v1006, %v1008
        %v1010 = vmul.f32 %v1007, %v1008
        %v1011 = vperm.slane %v874, 2
        %v1012 = vadd.f32 %v1009, %v1011
        %v1013 = vadd.f32 %v1010, %v1011
        %v1014 = vpack.c.bf16 %v1013, %v1012
        %v1015 = vld [vmem:[%s724] sm:$0x7]
        %v1016 = vld [vmem:[%s720] sm:$0xf]
        %v1017 = vld [vmem:[%s720 + $0x4] sm:$0xf]
        %v1018 = vld [vmem:[%s720 + $0x8] sm:$0xf]
        %v1019 = vld [vmem:[%s720 + $0xc] sm:$0xf]
        %v1020 = vld [vmem:[%s720 + $0x10] sm:$0xf]
        %v1021 = vld [vmem:[%s720 + $0x14] sm:$0xf]
        %v1022 = vld [vmem:[%s720 + $0x18] sm:$0xf]
        %v1023 = vld [vmem:[%s720 + $0x1c] sm:$0xf]
        %v1024 = vperm.slane %v1015, 0
        %v1033 = vunpack.c.l.b16 %v1016
        %v1034 = vunpack.c.l.b16 %v1017
        %v1035 = vunpack.c.l.b16 %v1018
        %v1036 = vunpack.c.l.b16 %v1019
        %v1037 = vunpack.c.l.b16 %v1020
        %v1038 = vunpack.c.l.b16 %v1021
        %v1039 = vunpack.c.l.b16 %v1022
        %v1040 = vunpack.c.l.b16 %v1023
        %v1041 = vpack.c.b16 %v1034, %v1033
        %v1042 = vpack.c.b16 %v1036, %v1035
        %v1043 = vpack.c.b16 %v1038, %v1037
        %v1044 = vpack.c.b16 %v1040, %v1039
        %v1050 = vsel %vm956, %v1014, 0
        %1052 = vmatpush.bf16.msra.mxu0 0
        %1053 = vmatpush.bf16.msra.mxu0 0
        %1054 = vmatpush.bf16.msra.mxu0 0
        %1055 = vmatpush.bf16.msra.mxu0 0
        %1056 = vmatpush.bf16.msra.mxu0 %v1044
        %1057 = vmatpush.bf16.msra.mxu0 %v1043
        %1058 = vmatpush.bf16.msra.mxu0 %v1042
        %1059 = vmatpush.bf16.msra.mxu0 %v1041
        %1060 = vmatmul.bf16.gmra.mxu0 %v1050
        %v1061 = vpop.f32.mrf.mxu0
        %v1062 = vadd.f32 %v1024, %v1061
        %v1063 = vpop.f32.mrf.mxu0
        %v1064 = vadd.f32 %v1024, %v1063
        %1065 = vdwg.mxu0
        %v1066 = vmax.f32 %v1062, 0.0
        %v1067 = vmax.f32 %v1064, 0.0
        %v1068 = vsel %vm800, %v1066, 0.0
        %1069 = vadd.xlane.f32.xlu0 %v1068
        %v1070 = vpop.xlane.xlu0 %1069
        %v1071 = vsel %vm800, %v1067, 0.0
        %1072 = vadd.xlane.f32.xlu0 %v1071
        %v1073 = vpop.xlane.xlu0 %1072
        %v1074 = vrcp.pop 32.0
        %v1075 = vmul.f32 32.0, %v1074
        %v1076 = vsub.f32 1.0, %v1075
        %v1077 = vmul.f32 %v1074, %v1076
        %v1078 = vadd.f32 %v1074, %v1077
        %vm1079 = vweird.f32 %v1074
        %v1080 = vsel %vm1079, %v1074, %v1078
        %v1081 = vmul.f32 %v1070, %v1080
        %v1082 = vmul.f32 %v1073, %v1080
        %v1083 = vsub.f32 %v1066, %v1081
        %v1084 = vsub.f32 %v1067, %v1082
        %v1085 = vmul.f32 %v1083, %v1083
        %v1086 = vmul.f32 %v1084, %v1084
        %v1087 = vsel %vm800, %v1085, 0.0
        %1088 = vadd.xlane.f32.xlu0 %v1087
        %v1089 = vpop.xlane.xlu0 %1088
        %v1090 = vsel %vm800, %v1086, 0.0
        %1091 = vadd.xlane.f32.xlu0 %v1090
        %v1092 = vpop.xlane.xlu0 %1091
        %v1093 = vmul.f32 %v1089, %v1080
        %v1094 = vmul.f32 %v1092, %v1080
        %v1095 = vadd.f32 %v1093, 1e-05
        %v1096 = vadd.f32 %v1094, 1e-05
        %v1097 = vrsqrt.pop %v1095
        %v1098 = vmul.f32 %v1097, %v1095
        %v1099 = vmul.f32 %v1098, %v1097
        %v1100 = vmul.f32 0.5, %v1099
        %v1101 = vsub.f32 1.5, %v1100
        %v1102 = vmul.f32 %v1097, %v1101
        %vm1103 = vweird.f32 %v1095
        %vm1104 = vweird.f32 %v1097
        %vm1105 = vmor %vm1103, %vm1104
        %v1106 = vsel %vm1105, %v1097, %v1102
        %v1107 = vrsqrt.pop %v1096
        %v1108 = vmul.f32 %v1107, %v1096
        %v1109 = vmul.f32 %v1108, %v1107
        %v1110 = vmul.f32 0.5, %v1109
        %v1111 = vsub.f32 1.5, %v1110
        %v1112 = vmul.f32 %v1107, %v1111
        %vm1113 = vweird.f32 %v1096
        %vm1114 = vweird.f32 %v1107
        %vm1115 = vmor %vm1113, %vm1114
        %v1116 = vsel %vm1115, %v1107, %v1112
        %v1117 = vmul.f32 %v1083, %v1106
        %v1118 = vmul.f32 %v1084, %v1116
        %v1119 = vperm.slane %v1015, 1
        %v1120 = vmul.f32 %v1117, %v1119
        %v1121 = vmul.f32 %v1118, %v1119
        %v1122 = vperm.slane %v1015, 2
        %v1123 = vadd.f32 %v1120, %v1122
        %v1124 = vadd.f32 %v1121, %v1122
        %v1125 = vpack.c.bf16 %v1124, %v1123
        %v1126 = vld [vmem:[%s734] sm:$0x77]
        %v1127 = vld [vmem:[%s729] sm:$0xff]
        %v1128 = vld [vmem:[%s729 + $0x8] sm:$0xff]
        %v1129 = vld [vmem:[%s729 + $0x10] sm:$0xff]
        %v1130 = vld [vmem:[%s729 + $0x18] sm:$0xff]
        %v1132 = vperm.slane %v1126, 0
        %v1133 = vperm.slane %v1126, 4
        %v1136 = vperm.slane %v1132, 0
        %v1137 = vperm.slane %v1133, 0
        %v1142 = vunpack.c.l.b16 %v1127
        %v1143 = vunpack.c.h.b16 %v1127
        %v1144 = vunpack.c.l.b16 %v1128
        %v1145 = vunpack.c.h.b16 %v1128
        %v1146 = vunpack.c.l.b16 %v1129
        %v1147 = vunpack.c.h.b16 %v1129
        %v1148 = vunpack.c.l.b16 %v1130
        %v1149 = vunpack.c.h.b16 %v1130
        %v1150 = vpack.c.b16 %v1144, %v1142
        %v1151 = vpack.c.b16 %v1145, %v1143
        %v1152 = vpack.c.b16 %v1148, %v1146
        %v1153 = vpack.c.b16 %v1149, %v1147
        %v1159 = vsel %vm800, %v1125, 0
        %1161 = vmatpush.bf16.msra.mxu0 0
        %1162 = vmatpush.bf16.msra.mxu0 0
        %1163 = vmatpush.bf16.msra.mxu0 0
        %1164 = vmatpush.bf16.msra.mxu0 0
        %1165 = vmatpush.bf16.msra.mxu0 0
        %1166 = vmatpush.bf16.msra.mxu0 0
        %1167 = vmatpush.bf16.msra.mxu0 %v1152
        %1168 = vmatpush.bf16.msra.mxu0 %v1150
        %1169 = vmatmul.bf16.gmra.mxu0 %v1159
        %v1170 = vpop.f32.mrf.mxu0
        %v1171 = vadd.f32 %v1136, %v1170
        %v1172 = vpop.f32.mrf.mxu0
        %v1173 = vadd.f32 %v1136, %v1172
        %1174 = vdwg.mxu0
        %1175 = vmatpush.bf16.msra.mxu0 0
        %1176 = vmatpush.bf16.msra.mxu0 0
        %1177 = vmatpush.bf16.msra.mxu0 0
        %1178 = vmatpush.bf16.msra.mxu0 0
        %1179 = vmatpush.bf16.msra.mxu0 0
        %1180 = vmatpush.bf16.msra.mxu0 0
        %1181 = vmatpush.bf16.msra.mxu0 %v1153
        %1182 = vmatpush.bf16.msra.mxu0 %v1151
        %1183 = vmatmul.bf16.gmra.mxu0 %v1159
        %v1184 = vpop.f32.mrf.mxu0
        %v1185 = vadd.f32 %v1137, %v1184
        %v1186 = vpop.f32.mrf.mxu0
        %v1187 = vadd.f32 %v1137, %v1186
        %1188 = vdwg.mxu0
        %v1189 = vmax.f32 %v1171, 0.0
        %v1190 = vmax.f32 %v1185, 0.0
        %v1191 = vmax.f32 %v1173, 0.0
        %v1192 = vmax.f32 %v1187, 0.0
        %v1193 = vadd.f32 %v1189, %v1190
        %1194 = vadd.xlane.f32.xlu0 %v1193
        %v1195 = vpop.xlane.xlu0 %1194
        %v1196 = vadd.f32 %v1191, %v1192
        %1197 = vadd.xlane.f32.xlu0 %v1196
        %v1198 = vpop.xlane.xlu0 %1197
        %v1199 = vrcp.pop 256.0
        %v1200 = vmul.f32 256.0, %v1199
        %v1201 = vsub.f32 1.0, %v1200
        %v1202 = vmul.f32 %v1199, %v1201
        %v1203 = vadd.f32 %v1199, %v1202
        %vm1204 = vweird.f32 %v1199
        %v1205 = vsel %vm1204, %v1199, %v1203
        %v1206 = vmul.f32 %v1195, %v1205
        %v1207 = vmul.f32 %v1198, %v1205
        %v1208 = vsub.f32 %v1189, %v1206
        %v1209 = vsub.f32 %v1190, %v1206
        %v1210 = vsub.f32 %v1191, %v1207
        %v1211 = vsub.f32 %v1192, %v1207
        %v1212 = vmul.f32 %v1208, %v1208
        %v1213 = vmul.f32 %v1209, %v1209
        %v1214 = vmul.f32 %v1210, %v1210
        %v1215 = vmul.f32 %v1211, %v1211
        %v1216 = vadd.f32 %v1212, %v1213
        %1217 = vadd.xlane.f32.xlu0 %v1216
        %v1218 = vpop.xlane.xlu0 %1217
        %v1219 = vadd.f32 %v1214, %v1215
        %1220 = vadd.xlane.f32.xlu0 %v1219
        %v1221 = vpop.xlane.xlu0 %1220
        %v1222 = vmul.f32 %v1218, %v1205
        %v1223 = vmul.f32 %v1221, %v1205
        %v1224 = vadd.f32 %v1222, 1e-05
        %v1225 = vadd.f32 %v1223, 1e-05
        %v1226 = vrsqrt.pop %v1224
        %v1227 = vmul.f32 %v1226, %v1224
        %v1228 = vmul.f32 %v1227, %v1226
        %v1229 = vmul.f32 0.5, %v1228
        %v1230 = vsub.f32 1.5, %v1229
        %v1231 = vmul.f32 %v1226, %v1230
        %vm1232 = vweird.f32 %v1224
        %vm1233 = vweird.f32 %v1226
        %vm1234 = vmor %vm1232, %vm1233
        %v1235 = vsel %vm1234, %v1226, %v1231
        %v1236 = vrsqrt.pop %v1225
        %v1237 = vmul.f32 %v1236, %v1225
        %v1238 = vmul.f32 %v1237, %v1236
        %v1239 = vmul.f32 0.5, %v1238
        %v1240 = vsub.f32 1.5, %v1239
        %v1241 = vmul.f32 %v1236, %v1240
        %vm1242 = vweird.f32 %v1225
        %vm1243 = vweird.f32 %v1236
        %vm1244 = vmor %vm1242, %vm1243
        %v1245 = vsel %vm1244, %v1236, %v1241
        %v1246 = vmul.f32 %v1208, %v1235
        %v1247 = vmul.f32 %v1209, %v1235
        %v1248 = vmul.f32 %v1210, %v1245
        %v1249 = vmul.f32 %v1211, %v1245
        %v1250 = vperm.slane %v1126, 1
        %v1251 = vperm.slane %v1126, 5
        %v1254 = vperm.slane %v1250, 1
        %v1255 = vperm.slane %v1251, 1
        %v1256 = vmul.f32 %v1246, %v1254
        %v1257 = vmul.f32 %v1247, %v1255
        %v1258 = vmul.f32 %v1248, %v1254
        %v1259 = vmul.f32 %v1249, %v1255
        %v1260 = vperm.slane %v1126, 2
        %v1261 = vperm.slane %v1126, 6
        %v1264 = vperm.slane %v1260, 2
        %v1265 = vperm.slane %v1261, 2
        %v1266 = vadd.f32 %v1256, %v1264
        %v1267 = vadd.f32 %v1257, %v1265
        %v1268 = vadd.f32 %v1258, %v1264
        %v1269 = vadd.f32 %v1259, %v1265
        %v1270 = vpack.c.bf16 %v1268, %v1266
        %v1271 = vpack.c.bf16 %v1269, %v1267
        %v1272 = vld [vmem:[%s743] sm:$0x7]
        %v1273 = vld [vmem:[%s739] sm:$0xf]
        %v1274 = vld [vmem:[%s739 + $0x4] sm:$0xf]
        %v1275 = vld [vmem:[%s739 + $0x8] sm:$0xf]
        %v1276 = vld [vmem:[%s739 + $0xc] sm:$0xf]
        %v1277 = vld [vmem:[%s739 + $0x10] sm:$0xf]
        %v1278 = vld [vmem:[%s739 + $0x14] sm:$0xf]
        %v1279 = vld [vmem:[%s739 + $0x18] sm:$0xf]
        %v1280 = vld [vmem:[%s739 + $0x1c] sm:$0xf]
        %v1281 = vld [vmem:[%s739 + $0x20] sm:$0xf]
        %v1282 = vld [vmem:[%s739 + $0x24] sm:$0xf]
        %v1283 = vld [vmem:[%s739 + $0x28] sm:$0xf]
        %v1284 = vld [vmem:[%s739 + $0x2c] sm:$0xf]
        %v1285 = vld [vmem:[%s739 + $0x30] sm:$0xf]
        %v1286 = vld [vmem:[%s739 + $0x34] sm:$0xf]
        %v1287 = vld [vmem:[%s739 + $0x38] sm:$0xf]
        %v1288 = vld [vmem:[%s739 + $0x3c] sm:$0xf]
        %v1289 = vld [vmem:[%s739 + $0x40] sm:$0xf]
        %v1290 = vld [vmem:[%s739 + $0x44] sm:$0xf]
        %v1291 = vld [vmem:[%s739 + $0x48] sm:$0xf]
        %v1292 = vld [vmem:[%s739 + $0x4c] sm:$0xf]
        %v1293 = vld [vmem:[%s739 + $0x50] sm:$0xf]
        %v1294 = vld [vmem:[%s739 + $0x54] sm:$0xf]
        %v1295 = vld [vmem:[%s739 + $0x58] sm:$0xf]
        %v1296 = vld [vmem:[%s739 + $0x5c] sm:$0xf]
        %v1297 = vld [vmem:[%s739 + $0x60] sm:$0xf]
        %v1298 = vld [vmem:[%s739 + $0x64] sm:$0xf]
        %v1299 = vld [vmem:[%s739 + $0x68] sm:$0xf]
        %v1300 = vld [vmem:[%s739 + $0x6c] sm:$0xf]
        %v1301 = vld [vmem:[%s739 + $0x70] sm:$0xf]
        %v1302 = vld [vmem:[%s739 + $0x74] sm:$0xf]
        %v1303 = vld [vmem:[%s739 + $0x78] sm:$0xf]
        %v1304 = vld [vmem:[%s739 + $0x7c] sm:$0xf]
        %v1305 = vperm.slane %v1272, 0
        %v1338 = vunpack.c.l.b16 %v1273
        %v1339 = vunpack.c.l.b16 %v1274
        %v1340 = vunpack.c.l.b16 %v1275
        %v1341 = vunpack.c.l.b16 %v1276
        %v1342 = vunpack.c.l.b16 %v1277
        %v1343 = vunpack.c.l.b16 %v1278
        %v1344 = vunpack.c.l.b16 %v1279
        %v1345 = vunpack.c.l.b16 %v1280
        %v1346 = vunpack.c.l.b16 %v1281
        %v1347 = vunpack.c.l.b16 %v1282
        %v1348 = vunpack.c.l.b16 %v1283
        %v1349 = vunpack.c.l.b16 %v1284
        %v1350 = vunpack.c.l.b16 %v1285
        %v1351 = vunpack.c.l.b16 %v1286
        %v1352 = vunpack.c.l.b16 %v1287
        %v1353 = vunpack.c.l.b16 %v1288
        %v1354 = vunpack.c.l.b16 %v1289
        %v1355 = vunpack.c.l.b16 %v1290
        %v1356 = vunpack.c.l.b16 %v1291
        %v1357 = vunpack.c.l.b16 %v1292
        %v1358 = vunpack.c.l.b16 %v1293
        %v1359 = vunpack.c.l.b16 %v1294
        %v1360 = vunpack.c.l.b16 %v1295
        %v1361 = vunpack.c.l.b16 %v1296
        %v1362 = vunpack.c.l.b16 %v1297
        %v1363 = vunpack.c.l.b16 %v1298
        %v1364 = vunpack.c.l.b16 %v1299
        %v1365 = vunpack.c.l.b16 %v1300
        %v1366 = vunpack.c.l.b16 %v1301
        %v1367 = vunpack.c.l.b16 %v1302
        %v1368 = vunpack.c.l.b16 %v1303
        %v1369 = vunpack.c.l.b16 %v1304
        %v1370 = vpack.c.b16 %v1339, %v1338
        %v1371 = vpack.c.b16 %v1341, %v1340
        %v1372 = vpack.c.b16 %v1343, %v1342
        %v1373 = vpack.c.b16 %v1345, %v1344
        %v1374 = vpack.c.b16 %v1347, %v1346
        %v1375 = vpack.c.b16 %v1349, %v1348
        %v1376 = vpack.c.b16 %v1351, %v1350
        %v1377 = vpack.c.b16 %v1353, %v1352
        %v1378 = vpack.c.b16 %v1355, %v1354
        %v1379 = vpack.c.b16 %v1357, %v1356
        %v1380 = vpack.c.b16 %v1359, %v1358
        %v1381 = vpack.c.b16 %v1361, %v1360
        %v1382 = vpack.c.b16 %v1363, %v1362
        %v1383 = vpack.c.b16 %v1365, %v1364
        %v1384 = vpack.c.b16 %v1367, %v1366
        %v1385 = vpack.c.b16 %v1369, %v1368
        %1402 = vmatpush.bf16.msra.mxu0 %v1377
        %1403 = vmatpush.bf16.msra.mxu0 %v1376
        %1404 = vmatpush.bf16.msra.mxu0 %v1375
        %1405 = vmatpush.bf16.msra.mxu0 %v1374
        %1406 = vmatpush.bf16.msra.mxu0 %v1373
        %1407 = vmatpush.bf16.msra.mxu0 %v1372
        %1408 = vmatpush.bf16.msra.mxu0 %v1371
        %1409 = vmatpush.bf16.msra.mxu0 %v1370
        %1410 = vmatmul.bf16.gmra.mxu0 %v1270
        %v1411 = vpop.f32.mrf.mxu0
        %v1412 = vadd.f32 %v1305, %v1411
        %v1413 = vpop.f32.mrf.mxu0
        %v1414 = vadd.f32 %v1305, %v1413
        %1415 = vdwg.mxu0
        %1416 = vmatpush.bf16.msra.mxu0 %v1385
        %1417 = vmatpush.bf16.msra.mxu0 %v1384
        %1418 = vmatpush.bf16.msra.mxu0 %v1383
        %1419 = vmatpush.bf16.msra.mxu0 %v1382
        %1420 = vmatpush.bf16.msra.mxu0 %v1381
        %1421 = vmatpush.bf16.msra.mxu0 %v1380
        %1422 = vmatpush.bf16.msra.mxu0 %v1379
        %1423 = vmatpush.bf16.msra.mxu0 %v1378
        %1424 = vmatmul.bf16.gmra.mxu0 %v1271
        %v1425 = vpop.f32.mrf.mxu0
        %v1426 = vadd.f32 %v1412, %v1425
        %v1427 = vpop.f32.mrf.mxu0
        %v1428 = vadd.f32 %v1414, %v1427
        %1429 = vdwg.mxu0
        %v1430 = vmax.f32 %v1426, 0.0
        %v1431 = vmax.f32 %v1428, 0.0
        %1432 = vadd.xlane.f32.xlu0 %v1430
        %v1433 = vpop.xlane.xlu0 %1432
        %1434 = vadd.xlane.f32.xlu0 %v1431
        %v1435 = vpop.xlane.xlu0 %1434
        %v1436 = vmul.f32 %v1433, %v830
        %v1437 = vmul.f32 %v1435, %v830
        %v1438 = vsub.f32 %v1430, %v1436
        %v1439 = vsub.f32 %v1431, %v1437
        %v1440 = vmul.f32 %v1438, %v1438
        %v1441 = vmul.f32 %v1439, %v1439
        %1442 = vadd.xlane.f32.xlu0 %v1440
        %v1443 = vpop.xlane.xlu0 %1442
        %1444 = vadd.xlane.f32.xlu0 %v1441
        %v1445 = vpop.xlane.xlu0 %1444
        %v1446 = vmul.f32 %v1443, %v830
        %v1447 = vmul.f32 %v1445, %v830
        %v1448 = vadd.f32 %v1446, 1e-05
        %v1449 = vadd.f32 %v1447, 1e-05
        %v1450 = vrsqrt.pop %v1448
        %v1451 = vmul.f32 %v1450, %v1448
        %v1452 = vmul.f32 %v1451, %v1450
        %v1453 = vmul.f32 0.5, %v1452
        %v1454 = vsub.f32 1.5, %v1453
        %v1455 = vmul.f32 %v1450, %v1454
        %vm1456 = vweird.f32 %v1448
        %vm1457 = vweird.f32 %v1450
        %vm1458 = vmor %vm1456, %vm1457
        %v1459 = vsel %vm1458, %v1450, %v1455
        %v1460 = vrsqrt.pop %v1449
        %v1461 = vmul.f32 %v1460, %v1449
        %v1462 = vmul.f32 %v1461, %v1460
        %v1463 = vmul.f32 0.5, %v1462
        %v1464 = vsub.f32 1.5, %v1463
        %v1465 = vmul.f32 %v1460, %v1464
        %vm1466 = vweird.f32 %v1449
        %vm1467 = vweird.f32 %v1460
        %vm1468 = vmor %vm1466, %vm1467
        %v1469 = vsel %vm1468, %v1460, %v1465
        %v1470 = vmul.f32 %v1438, %v1459
        %v1471 = vmul.f32 %v1439, %v1469
        %v1472 = vperm.slane %v1272, 1
        %v1473 = vmul.f32 %v1470, %v1472
        %v1474 = vmul.f32 %v1471, %v1472
        %v1475 = vperm.slane %v1272, 2
        %v1476 = vadd.f32 %v1473, %v1475
        %v1477 = vadd.f32 %v1474, %v1475
        %v1478 = vpack.c.bf16 %v1477, %v1476
        %v1479 = vld [vmem:[%s752] sm:$0x7]
        %v1480 = vld [vmem:[%s748] sm:$0xf]
        %v1481 = vld [vmem:[%s748 + $0x4] sm:$0xf]
        %v1482 = vld [vmem:[%s748 + $0x8] sm:$0xf]
        %v1483 = vld [vmem:[%s748 + $0xc] sm:$0xf]
        %v1484 = vld [vmem:[%s748 + $0x10] sm:$0xf]
        %v1485 = vld [vmem:[%s748 + $0x14] sm:$0xf]
        %v1486 = vld [vmem:[%s748 + $0x18] sm:$0xf]
        %v1487 = vld [vmem:[%s748 + $0x1c] sm:$0xf]
        %v1488 = vld [vmem:[%s748 + $0x20] sm:$0xf]
        %v1489 = vld [vmem:[%s748 + $0x24] sm:$0xf]
        %v1490 = vld [vmem:[%s748 + $0x28] sm:$0xf]
        %v1491 = vld [vmem:[%s748 + $0x2c] sm:$0xf]
        %v1492 = vld [vmem:[%s748 + $0x30] sm:$0xf]
        %v1493 = vld [vmem:[%s748 + $0x34] sm:$0xf]
        %v1494 = vld [vmem:[%s748 + $0x38] sm:$0xf]
        %v1495 = vld [vmem:[%s748 + $0x3c] sm:$0xf]
        %v1496 = vperm.slane %v1479, 0
        %v1513 = vunpack.c.l.b16 %v1480
        %v1514 = vunpack.c.l.b16 %v1481
        %v1515 = vunpack.c.l.b16 %v1482
        %v1516 = vunpack.c.l.b16 %v1483
        %v1517 = vunpack.c.l.b16 %v1484
        %v1518 = vunpack.c.l.b16 %v1485
        %v1519 = vunpack.c.l.b16 %v1486
        %v1520 = vunpack.c.l.b16 %v1487
        %v1521 = vunpack.c.l.b16 %v1488
        %v1522 = vunpack.c.l.b16 %v1489
        %v1523 = vunpack.c.l.b16 %v1490
        %v1524 = vunpack.c.l.b16 %v1491
        %v1525 = vunpack.c.l.b16 %v1492
        %v1526 = vunpack.c.l.b16 %v1493
        %v1527 = vunpack.c.l.b16 %v1494
        %v1528 = vunpack.c.l.b16 %v1495
        %v1529 = vpack.c.b16 %v1514, %v1513
        %v1530 = vpack.c.b16 %v1516, %v1515
        %v1531 = vpack.c.b16 %v1518, %v1517
        %v1532 = vpack.c.b16 %v1520, %v1519
        %v1533 = vpack.c.b16 %v1522, %v1521
        %v1534 = vpack.c.b16 %v1524, %v1523
        %v1535 = vpack.c.b16 %v1526, %v1525
        %v1536 = vpack.c.b16 %v1528, %v1527
        %1545 = vmatpush.bf16.msra.mxu0 %v1536
        %1546 = vmatpush.bf16.msra.mxu0 %v1535
        %1547 = vmatpush.bf16.msra.mxu0 %v1534
        %1548 = vmatpush.bf16.msra.mxu0 %v1533
        %1549 = vmatpush.bf16.msra.mxu0 %v1532
        %1550 = vmatpush.bf16.msra.mxu0 %v1531
        %1551 = vmatpush.bf16.msra.mxu0 %v1530
        %1552 = vmatpush.bf16.msra.mxu0 %v1529
        %1553 = vmatmul.bf16.gmra.mxu0 %v1478
        %v1554 = vpop.f32.mrf.mxu0
        %v1555 = vadd.f32 %v1496, %v1554
        %v1556 = vpop.f32.mrf.mxu0
        %v1557 = vadd.f32 %v1496, %v1556
        %1558 = vdwg.mxu0
        %v1559 = vmax.f32 %v1555, 0.0
        %v1560 = vmax.f32 %v1557, 0.0
        %v1561 = vsel %vm956, %v1559, 0.0
        %1562 = vadd.xlane.f32.xlu0 %v1561
        %v1563 = vpop.xlane.xlu0 %1562
        %v1564 = vsel %vm956, %v1560, 0.0
        %1565 = vadd.xlane.f32.xlu0 %v1564
        %v1566 = vpop.xlane.xlu0 %1565
        %v1567 = vmul.f32 %v1563, %v969
        %v1568 = vmul.f32 %v1566, %v969
        %v1569 = vsub.f32 %v1559, %v1567
        %v1570 = vsub.f32 %v1560, %v1568
        %v1571 = vmul.f32 %v1569, %v1569
        %v1572 = vmul.f32 %v1570, %v1570
        %v1573 = vsel %vm956, %v1571, 0.0
        %1574 = vadd.xlane.f32.xlu0 %v1573
        %v1575 = vpop.xlane.xlu0 %1574
        %v1576 = vsel %vm956, %v1572, 0.0
        %1577 = vadd.xlane.f32.xlu0 %v1576
        %v1578 = vpop.xlane.xlu0 %1577
        %v1579 = vmul.f32 %v1575, %v969
        %v1580 = vmul.f32 %v1578, %v969
        %v1581 = vadd.f32 %v1579, 1e-05
        %v1582 = vadd.f32 %v1580, 1e-05
        %v1583 = vrsqrt.pop %v1581
        %v1584 = vmul.f32 %v1583, %v1581
        %v1585 = vmul.f32 %v1584, %v1583
        %v1586 = vmul.f32 0.5, %v1585
        %v1587 = vsub.f32 1.5, %v1586
        %v1588 = vmul.f32 %v1583, %v1587
        %vm1589 = vweird.f32 %v1581
        %vm1590 = vweird.f32 %v1583
        %vm1591 = vmor %vm1589, %vm1590
        %v1592 = vsel %vm1591, %v1583, %v1588
        %v1593 = vrsqrt.pop %v1582
        %v1594 = vmul.f32 %v1593, %v1582
        %v1595 = vmul.f32 %v1594, %v1593
        %v1596 = vmul.f32 0.5, %v1595
        %v1597 = vsub.f32 1.5, %v1596
        %v1598 = vmul.f32 %v1593, %v1597
        %vm1599 = vweird.f32 %v1582
        %vm1600 = vweird.f32 %v1593
        %vm1601 = vmor %vm1599, %vm1600
        %v1602 = vsel %vm1601, %v1593, %v1598
        %v1603 = vmul.f32 %v1569, %v1592
        %v1604 = vmul.f32 %v1570, %v1602
        %v1605 = vperm.slane %v1479, 1
        %v1606 = vmul.f32 %v1603, %v1605
        %v1607 = vmul.f32 %v1604, %v1605
        %v1608 = vperm.slane %v1479, 2
        %v1609 = vadd.f32 %v1606, %v1608
        %v1610 = vadd.f32 %v1607, %v1608
        %v1611 = vpack.c.bf16 %v1610, %v1609
        %v1612 = vld [vmem:[%s761] sm:$0x7]
        %v1613 = vld [vmem:[%s757] sm:$0xf]
        %v1614 = vld [vmem:[%s757 + $0x4] sm:$0xf]
        %v1615 = vld [vmem:[%s757 + $0x8] sm:$0xf]
        %v1616 = vld [vmem:[%s757 + $0xc] sm:$0xf]
        %v1617 = vld [vmem:[%s757 + $0x10] sm:$0xf]
        %v1618 = vld [vmem:[%s757 + $0x14] sm:$0xf]
        %v1619 = vld [vmem:[%s757 + $0x18] sm:$0xf]
        %v1620 = vld [vmem:[%s757 + $0x1c] sm:$0xf]
        %v1621 = vperm.slane %v1612, 0
        %v1630 = vunpack.c.l.b16 %v1613
        %v1631 = vunpack.c.l.b16 %v1614
        %v1632 = vunpack.c.l.b16 %v1615
        %v1633 = vunpack.c.l.b16 %v1616
        %v1634 = vunpack.c.l.b16 %v1617
        %v1635 = vunpack.c.l.b16 %v1618
        %v1636 = vunpack.c.l.b16 %v1619
        %v1637 = vunpack.c.l.b16 %v1620
        %v1638 = vpack.c.b16 %v1631, %v1630
        %v1639 = vpack.c.b16 %v1633, %v1632
        %v1640 = vpack.c.b16 %v1635, %v1634
        %v1641 = vpack.c.b16 %v1637, %v1636
        %v1647 = vsel %vm956, %v1611, 0
        %1649 = vmatpush.bf16.msra.mxu0 0
        %1650 = vmatpush.bf16.msra.mxu0 0
        %1651 = vmatpush.bf16.msra.mxu0 0
        %1652 = vmatpush.bf16.msra.mxu0 0
        %1653 = vmatpush.bf16.msra.mxu0 %v1641
        %1654 = vmatpush.bf16.msra.mxu0 %v1640
        %1655 = vmatpush.bf16.msra.mxu0 %v1639
        %1656 = vmatpush.bf16.msra.mxu0 %v1638
        %1657 = vmatmul.bf16.gmra.mxu0 %v1647
        %v1658 = vpop.f32.mrf.mxu0
        %v1659 = vadd.f32 %v1621, %v1658
        %v1660 = vpop.f32.mrf.mxu0
        %v1661 = vadd.f32 %v1621, %v1660
        %1662 = vdwg.mxu0
        %v1663 = vsel %vm800, %v1659, 0.0
        %1664 = vadd.xlane.f32.xlu0 %v1663
        %v1665 = vpop.xlane.xlu0 %1664
        %v1666 = vsel %vm800, %v1661, 0.0
        %1667 = vadd.xlane.f32.xlu0 %v1666
        %v1668 = vpop.xlane.xlu0 %1667
        %v1669 = vmul.f32 %v1665, %v1080
        %v1670 = vmul.f32 %v1668, %v1080
        %v1671 = vsub.f32 %v1659, %v1669
        %v1672 = vsub.f32 %v1661, %v1670
        %v1673 = vmul.f32 %v1671, %v1671
        %v1674 = vmul.f32 %v1672, %v1672
        %v1675 = vsel %vm800, %v1673, 0.0
        %1676 = vadd.xlane.f32.xlu0 %v1675
        %v1677 = vpop.xlane.xlu0 %1676
        %v1678 = vsel %vm800, %v1674, 0.0
        %1679 = vadd.xlane.f32.xlu0 %v1678
        %v1680 = vpop.xlane.xlu0 %1679
        %v1681 = vmul.f32 %v1677, %v1080
        %v1682 = vmul.f32 %v1680, %v1080
        %v1683 = vadd.f32 %v1681, 1e-05
        %v1684 = vadd.f32 %v1682, 1e-05
        %v1685 = vrsqrt.pop %v1683
        %v1686 = vmul.f32 %v1685, %v1683
        %v1687 = vmul.f32 %v1686, %v1685
        %v1688 = vmul.f32 0.5, %v1687
        %v1689 = vsub.f32 1.5, %v1688
        %v1690 = vmul.f32 %v1685, %v1689
        %vm1691 = vweird.f32 %v1683
        %vm1692 = vweird.f32 %v1685
        %vm1693 = vmor %vm1691, %vm1692
        %v1694 = vsel %vm1693, %v1685, %v1690
        %v1695 = vrsqrt.pop %v1684
        %v1696 = vmul.f32 %v1695, %v1684
        %v1697 = vmul.f32 %v1696, %v1695
        %v1698 = vmul.f32 0.5, %v1697
        %v1699 = vsub.f32 1.5, %v1698
        %v1700 = vmul.f32 %v1695, %v1699
        %vm1701 = vweird.f32 %v1684
        %vm1702 = vweird.f32 %v1695
        %vm1703 = vmor %vm1701, %vm1702
        %v1704 = vsel %vm1703, %v1695, %v1700
        %v1705 = vmul.f32 %v1671, %v1694
        %v1706 = vmul.f32 %v1672, %v1704
        %v1707 = vperm.slane %v1612, 1
        %v1708 = vmul.f32 %v1705, %v1707
        %v1709 = vmul.f32 %v1706, %v1707
        %v1710 = vperm.slane %v1612, 2
        %v1711 = vadd.f32 %v1708, %v1710
        %v1712 = vadd.f32 %v1709, %v1710
        %v1713 = vpack.c.bf16 %v1711, %v1711
        %v1714 = vpack.c.bf16 %v1712, %v1712
        %p1715 = scmp.ne.s32.totalorder %s32, 1
        // Predicated region
        $region85: #{residual_ffn_forward.1} parent=79 // pred_check
          %p1716 = pneg %p1715
        $region86: #{residual_ffn_forward.1} parent=79 // pred_check_branch
          %1718 = sbr.rel (%p1716) target = $region88
        $region87: #{residual_ffn_forward.1} parent=79 // pred_region
          %vm1719 = vcmask 257024
          %1720 = vst.msk [vmem:[#allocation2] sm:$0xf] %vm1719, %v1713
          %1721 = vst.msk [vmem:[#allocation2 + $0x4] sm:$0xf] %vm1719, %v1714
        $region88: #{residual_ffn_forward.1} parent=79 // pred_fallthru
          _
        %p1722 = scmp.eq.s32.totalorder %s32, 1
        // Predicated region
        $region89: #{residual_ffn_forward.1} parent=79 // pred_check
          %p1723 = pneg %p1722
        $region90: #{residual_ffn_forward.1} parent=79 // pred_check_branch
          %1725 = sbr.rel (%p1723) target = $region92
        $region91: #{residual_ffn_forward.1} parent=79 // pred_region
          %v1726 = vunpack.c.l.bf16 %v1713
          %v1727 = vunpack.c.l.bf16 %v1714
          %v1728 = vld [vmem:[%s696] sm:$0xff]
          %v1729 = vld [vmem:[%s696 + $0x8] sm:$0xff]
          %v1730 = vadd.f32 %v1726, %v1728
          %v1731 = vadd.f32 %v1727, %v1729
          %1732 = vst.msk [vmem:[#allocation3] sm:$0xff] %vm800, %v1730
          %1733 = vst.msk [vmem:[#allocation3 + $0x8] sm:$0xff] %vm800, %v1731
        $region92: #{residual_ffn_forward.1} parent=79 // pred_fallthru
          _
        // Predicated region
        $region93: #{residual_ffn_forward.1} parent=79 // pred_check
          %p1734 = pneg %p447
        $region94: #{residual_ffn_forward.1} parent=79 // pred_check_branch
          %1736 = sbr.rel (%p1734) target = $region96
        $region95: #{residual_ffn_forward.1} parent=79 // pred_region
          %s1737 = smul.u32 2, %s31
          %1739 = vsyncadd [#allocation4], 0
          %s1740 = smul.addr %s1737, 8
          %s1741 = scalar_lea.hbm %s15, %s1740
          %s1742 = sshll.u32 [#allocation3], 4
          %s1743 = int_to_ptr.vmem [resolvable:$true] %s1742
          %s1744 = sshll.u32 %s1741, 4
          %s1745 = int_to_ptr.hbm [resolvable:$true] %s1744
          %1750 = dma.vmem_to_hbm [thread:$0]  %s1743, 256, %s1745, [#allocation4], 128, 128, 8
        $region96: #{residual_ffn_forward.1} parent=79 // pred_fallthru
          _
        // Predicated region
        $region97: #{residual_ffn_forward.1} parent=79 // pred_check
          %p1751 = pneg %p447
        $region98: #{residual_ffn_forward.1} parent=79 // pred_check_branch
          %1753 = sbr.rel (%p1751) target = $region100
        $region99: #{residual_ffn_forward.1} parent=79 // pred_region
          %1755 = dma.done [#allocation4], 256
        $region100: #{residual_ffn_forward.1} parent=79 // pred_fallthru
          _
      $region80: #{residual_ffn_forward.1} parent=5 // pred_fallthru
        _
      %p1756 = scmp.le.s32.totalorder 2, %s22
      // Predicated region
      $region101: #{residual_ffn_forward.1} parent=5 // pred_check
        %p1757 = pneg %p1756
      $region102: #{residual_ffn_forward.1} parent=5 // pred_check_branch
        %1759 = sbr.rel (%p1757) target = $region104
      $region103: #{residual_ffn_forward.1} parent=5 // pred_region
        %s1760 = ssub.s32 %s22, 2
      $region104: #{residual_ffn_forward.1} parent=5 // pred_fallthru
        _
    $region6: #{residual_ffn_forward.1} parent=1 // loop_footer
      %s26 = sadd.s32 1, %s22
    $region7: #{residual_ffn_forward.1} parent=1 // loop_footer_branch
      %21 = sbr.rel target = $region3
    $region8: #{residual_ffn_forward.1} parent=1 // loop_exit
      _
    %1761 = vsyncpa [#allocation4], 1
    %s1762 = scalar_lea.sflag [#allocation4], 1
    %1763 = vsyncpa %s1762, 1

</llo_original>
